<compile_context>
chip_gen: v7x
topology: tpu7x:2x2x1
jax: 0.10.0
libtpu: 0.0.40
codegen_flags: <defaults>
</compile_context>

<pallas_src>
import math
import functools

import jax
import jax.numpy as jnp
from jax.experimental import pallas as pl
from jax.experimental.pallas import tpu as pltpu


def _block_kernel(x_ref,
                  w_qkv_ref, b_qkv_ref,
                  w_proj_ref, b_proj_ref,
                  w_fc1_ref, b_fc1_ref,
                  w_fc2_ref, b_fc2_ref,
                  o_ref,
                  y_scratch,
                  *, n_head, eps):
    # x_ref block: (1, T, C) — residual stream stays f32 throughout.
    x = x_ref[0].astype(jnp.float32)                      # (T, C)
    T, C = x.shape
    D = C // n_head

    def normalize(v):
        # Pure normalization; gamma/beta are folded into the next projection.
        mu = jnp.mean(v, axis=-1, keepdims=True)
        var = jnp.mean(jnp.square(v - mu), axis=-1, keepdims=True)
        return (v - mu) * jax.lax.rsqrt(var + eps)

    # ---------------- attention branch ----------------
    h = normalize(x)                                       # (T, C) f32

    # Fused QKV projection (LN1 affine + 1/sqrt(D) scale already folded in).
    qkv = jnp.dot(h.astype(jnp.bfloat16), w_qkv_ref[...],
                  preferred_element_type=jnp.float32) + b_qkv_ref[...]   # (T, 3C)

    q = qkv[:, :C].astype(jnp.bfloat16)
    k = qkv[:, C:2 * C].astype(jnp.bfloat16)
    v = qkv[:, 2 * C:].astype(jnp.bfloat16)

    # Per-head attention; each head writes straight into its lane slice of the
    # VMEM scratch, so no concatenate and only one head's intermediates live.
    for hd in range(n_head):
        sl = slice(hd * D, (hd + 1) * D)
        qh, kh, vh = q[:, sl], k[:, sl], v[:, sl]          # (T, D) bf16

        # q @ k^T without materializing a transpose of k.
        att = jax.lax.dot_general(
            qh, kh, dimension_numbers=(((1,), (1,)), ((), ())),
            preferred_element_type=jnp.float32)            # (T, T) f32

        att_max = jnp.max(att, axis=-1, keepdims=True)
        p = jnp.exp(att - att_max)
        inv_denom = pl.reciprocal(jnp.sum(p, axis=-1, keepdims=True),
                                  approx=True)
        p = p * inv_denom

        y_scratch[:, sl] = jnp.dot(p.astype(jnp.bfloat16), vh,
                                   preferred_element_type=jnp.float32)

    attn_out = jnp.dot(y_scratch[...].astype(jnp.bfloat16), w_proj_ref[...],
                       preferred_element_type=jnp.float32) + b_proj_ref[...]
    x = x + attn_out                                       # residual 1

    # ---------------- MLP branch ----------------
    h2 = normalize(x)                                      # LN2 affine folded into fc1
    m = jnp.dot(h2.astype(jnp.bfloat16), w_fc1_ref[...],
                preferred_element_type=jnp.float32) + b_fc1_ref[...]
    m = jnp.maximum(m, 0.0)                                # ReLU
    mlp_out = jnp.dot(m.astype(jnp.bfloat16), w_fc2_ref[...],
                      preferred_element_type=jnp.float32) + b_fc2_ref[...]

    o_ref[0] = (x + mlp_out).astype(o_ref.dtype)           # residual 2


def block_pallas(x, params, n_head):
    """x: (B, T, C) float32.  params: dict of PyTorch-shaped weights/biases."""
    B, T, C = x.shape
    assert C % n_head == 0
    D = C // n_head
    H = params["w_fc1"].shape[0]                           # block_exp * C
    scale = 1.0 / math.sqrt(D)

    bf16 = jnp.bfloat16
    f32 = jnp.float32

    # nn.Linear computes x @ W.T + b; pre-transpose, fuse QKV, fold LN1 affine
    # and the 1/sqrt(D) scale (all folds done in f32, then cast to bf16).
    w_qkv = jnp.concatenate(
        [params["wq"].T, params["wk"].T, params["wv"].T], axis=1).astype(f32)   # (C, 3C)
    b_qkv = jnp.concatenate(
        [params["bq"], params["bk"], params["bv"]]).astype(f32)                 # (3C,)
    ln1_g = params["ln1_g"].astype(f32)
    ln1_b = params["ln1_b"].astype(f32)
    # (h*g + b) @ W = h @ (g[:,None]*W) + b @ W
    b_qkv = b_qkv + ln1_b @ w_qkv
    w_qkv = ln1_g[:, None] * w_qkv
    # fold 1/sqrt(D) into the Q columns
    q_scale = jnp.concatenate(
        [jnp.full((C,), scale, f32), jnp.ones((2 * C,), f32)])
    w_qkv = (w_qkv * q_scale[None, :]).astype(bf16)
    b_qkv = (b_qkv * q_scale).reshape(1, 3 * C)

    w_proj = params["wp"].T.astype(bf16)                   # (C, C)
    b_proj = params["bp"].reshape(1, C).astype(f32)

    # Fold LN2 affine into fc1.
    w_fc1 = params["w_fc1"].T.astype(f32)                  # (C, H)
    b_fc1 = params["b_fc1"].astype(f32)                    # (H,)
    ln2_g = params["ln2_g"].astype(f32)
    ln2_b = params["ln2_b"].astype(f32)
    b_fc1 = (b_fc1 + ln2_b @ w_fc1).reshape(1, H)
    w_fc1 = (ln2_g[:, None] * w_fc1).astype(bf16)

    w_fc2 = params["w_fc2"].T.astype(bf16)                 # (H, C)
    b_fc2 = params["b_fc2"].reshape(1, C).astype(f32)

    # Constant-index (grid-invariant) operands.
    def const_spec(shape):
        return pl.BlockSpec(shape, lambda b: (0, 0))

    kernel = functools.partial(_block_kernel, n_head=n_head, eps=1e-5)

    return pl.pallas_call(
        kernel,
        out_shape=jax.ShapeDtypeStruct((B, T, C), x.dtype),
        grid_spec=pltpu.PrefetchScalarGridSpec(
            num_scalar_prefetch=0,
            grid=(B,),
            in_specs=[
                pl.BlockSpec((1, T, C), lambda b: (b, 0, 0)),   # x
                const_spec((C, 3 * C)), const_spec((1, 3 * C)), # fused QKV (+LN1, +scale)
                const_spec((C, C)), const_spec((1, C)),         # proj
                const_spec((C, H)), const_spec((1, H)),         # fc1 (+LN2)
                const_spec((H, C)), const_spec((1, C)),         # fc2
            ],
            out_specs=pl.BlockSpec((1, T, C), lambda b: (b, 0, 0)),
            scratch_shapes=[pltpu.VMEM((T, C), jnp.float32)],   # per-head y slab
        ),
        compiler_params=pltpu.CompilerParams(
            dimension_semantics=("parallel",),
        ),
    )(x, w_qkv, b_qkv, w_proj, b_proj, w_fc1, b_fc1, w_fc2, b_fc2)


def init_params(key, n_embd, block_exp):
    """Deterministic PyTorch-style init: U(-1/sqrt(fan_in), 1/sqrt(fan_in))."""
    C = n_embd
    Hm = block_exp * C
    keys = jax.random.split(key, 16)

    def linear(kw, kb, fan_in, fan_out):
        bound = 1.0 / math.sqrt(fan_in)
        w = jax.random.uniform(kw, (fan_out, fan_in), minval=-bound,
                               maxval=bound, dtype=jnp.float32)
        b = jax.random.uniform(kb, (fan_out,), minval=-bound,
                               maxval=bound, dtype=jnp.float32)
        return w, b

    wq, bq = linear(keys[0], keys[1], C, C)
    wk, bk = linear(keys[2], keys[3], C, C)
    wv, bv = linear(keys[4], keys[5], C, C)
    wp, bp = linear(keys[6], keys[7], C, C)
    w1, b1 = linear(keys[8], keys[9], C, Hm)
    w2, b2 = linear(keys[10], keys[11], Hm, C)
    return {
        "wq": wq, "bq": bq, "wk": wk, "bk": bk, "wv": wv, "bv": bv,
        "wp": wp, "bp": bp,
        "w_fc1": w1, "b_fc1": b1, "w_fc2": w2, "b_fc2": b2,
        "ln1_g": 1.0 + 0.1 * jax.random.normal(keys[12], (C,), dtype=jnp.float32),
        "ln1_b": 0.1 * jax.random.normal(keys[13], (C,), dtype=jnp.float32),
        "ln2_g": 1.0 + 0.1 * jax.random.normal(keys[14], (C,), dtype=jnp.float32),
        "ln2_b": 0.1 * jax.random.normal(keys[15], (C,), dtype=jnp.float32),
    }


def block_ref(x, params, n_head):
    """Pure-JAX f32 reference matching the PyTorch Block forward (eval mode)."""
    eps = 1e-5
    B, T, C = x.shape
    D = C // n_head

    def ln(v, g, b):
        mu = v.mean(-1, keepdims=True)
        var = ((v - mu) ** 2).mean(-1, keepdims=True)
        return (v - mu) / jnp.sqrt(var + eps) * g + b

    lin = lambda v, w, b: v @ w.T + b

    h = ln(x, params["ln1_g"], params["ln1_b"])
    q = lin(h, params["wq"], params["bq"]).reshape(B, T, n_head, D).transpose(0, 2, 1, 3)
    k = lin(h, params["wk"], params["bk"]).reshape(B, T, n_head, D).transpose(0, 2, 1, 3)
    v = lin(h, params["wv"], params["bv"]).reshape(B, T, n_head, D).transpose(0, 2, 1, 3)
    att = jnp.einsum("bhtd,bhsd->bhts", q, k) * (1.0 / math.sqrt(D))
    att = jax.nn.softmax(att, axis=-1)
    y = jnp.einsum("bhts,bhsd->bhtd", att, v)
    y = y.transpose(0, 2, 1, 3).reshape(B, T, C)
    x = x + lin(y, params["wp"], params["bp"])

    h2 = ln(x, params["ln2_g"], params["ln2_b"])
    m = jax.nn.relu(lin(h2, params["w_fc1"], params["b_fc1"]))
    x = x + lin(m, params["w_fc2"], params["b_fc2"])
    return x


if __name__ == "__main__":
    # Small shapes consistent with the module: B=2, T=8, C=32, n_head=4, block_exp=4.
    B, T, C, n_head, block_exp = 2, 8, 32, 4, 4
    key = jax.random.PRNGKey(0)
    k_x, k_p = jax.random.split(key)
    x = jax.random.normal(k_x, (B, T, C), dtype=jnp.float32)
    params = init_params(k_p, C, block_exp)

    out = block_pallas(x, params, n_head)
    out = jax.block_until_ready(out)

    ref = block_ref(x, params, n_head)
    assert out.shape == (B, T, C)
    # bf16 matmul operands + approx reciprocal -> loosened (but tight for bf16) tolerance.
    assert jnp.allclose(out, ref, atol=5e-2, rtol=5e-2), "mismatch vs reference"

    print("KERNEL_OK")
</pallas_src>

<mosaic_0001>
module attributes {stable_mosaic.version = 11 : i64} {
  func.func @_block_kernel(%arg0: i32, %arg1: memref<1x8x32xf32, #tpu.memory_space<vmem>>, %arg2: memref<32x96xbf16, #tpu.memory_space<vmem>>, %arg3: memref<1x96xf32, #tpu.memory_space<vmem>>, %arg4: memref<32x32xbf16, #tpu.memory_space<vmem>>, %arg5: memref<1x32xf32, #tpu.memory_space<vmem>>, %arg6: memref<32x128xbf16, #tpu.memory_space<vmem>>, %arg7: memref<1x128xf32, #tpu.memory_space<vmem>>, %arg8: memref<128x32xbf16, #tpu.memory_space<vmem>>, %arg9: memref<1x32xf32, #tpu.memory_space<vmem>>, %arg10: memref<1x8x32xf32, #tpu.memory_space<vmem>>, %arg11: memref<8x32xf32, #tpu.memory_space<vmem>>) attributes {dimension_semantics = [#tpu.dimension_semantics<parallel>], iteration_bounds = array<i64: 2>, scalar_prefetch = 0 : i64, scratch_operands = 1 : i64, tpu.core_type = #tpu.core_type<tc>, window_params = [{transform_indices = @transform_0, window_bounds = array<i64: 1, 8, 32>}, {pipeline_mode = #tpu.pipeline_mode<synchronous>, transform_indices = @transform_1, window_bounds = array<i64: 32, 96>}, {pipeline_mode = #tpu.pipeline_mode<synchronous>, transform_indices = @transform_2, window_bounds = array<i64: 1, 96>}, {pipeline_mode = #tpu.pipeline_mode<synchronous>, transform_indices = @transform_3, window_bounds = array<i64: 32, 32>}, {pipeline_mode = #tpu.pipeline_mode<synchronous>, transform_indices = @transform_4, window_bounds = array<i64: 1, 32>}, {pipeline_mode = #tpu.pipeline_mode<synchronous>, transform_indices = @transform_5, window_bounds = array<i64: 32, 128>}, {pipeline_mode = #tpu.pipeline_mode<synchronous>, transform_indices = @transform_6, window_bounds = array<i64: 1, 128>}, {pipeline_mode = #tpu.pipeline_mode<synchronous>, transform_indices = @transform_7, window_bounds = array<i64: 128, 32>}, {pipeline_mode = #tpu.pipeline_mode<synchronous>, transform_indices = @transform_8, window_bounds = array<i64: 1, 32>}, {transform_indices = @transform_9, window_bounds = array<i64: 1, 8, 32>}]} {
    %c0 = arith.constant 0 : index
    %c0_0 = arith.constant 0 : index
    %c0_1 = arith.constant 0 : index
    %0 = vector.load %arg1[%c0, %c0_0, %c0_1] : memref<1x8x32xf32, #tpu.memory_space<vmem>>, vector<1x8x32xf32>
    %1 = vector.shape_cast %0 : vector<1x8x32xf32> to vector<8x32xf32>
    %cst = arith.constant dense<0.000000e+00> : vector<8xf32>
    %2 = vector.multi_reduction <add>, %1, %cst [1] : vector<8x32xf32> to vector<8xf32>
    %3 = vector.shape_cast %2 : vector<8xf32> to vector<8x1xf32>
    %cst_2 = arith.constant 3.200000e+01 : f32
    %4 = vector.broadcast %cst_2 : f32 to vector<8x1xf32>
    %5 = arith.divf %3, %4 : vector<8x1xf32>
    %6 = vector.broadcast %5 : vector<8x1xf32> to vector<8x32xf32>
    %7 = arith.subf %1, %6 : vector<8x32xf32>
    %8 = arith.mulf %7, %7 : vector<8x32xf32>
    %cst_3 = arith.constant dense<0.000000e+00> : vector<8xf32>
    %9 = vector.multi_reduction <add>, %8, %cst_3 [1] : vector<8x32xf32> to vector<8xf32>
    %10 = vector.shape_cast %9 : vector<8xf32> to vector<8x1xf32>
    %cst_4 = arith.constant 3.200000e+01 : f32
    %11 = vector.broadcast %cst_4 : f32 to vector<8x1xf32>
    %12 = arith.divf %10, %11 : vector<8x1xf32>
    %13 = vector.broadcast %5 : vector<8x1xf32> to vector<8x32xf32>
    %14 = arith.subf %1, %13 : vector<8x32xf32>
    %cst_5 = arith.constant 9.99999974E-6 : f32
    %15 = vector.broadcast %cst_5 : f32 to vector<8x1xf32>
    %16 = arith.addf %12, %15 : vector<8x1xf32>
    %17 = math.rsqrt %16 : vector<8x1xf32>
    %18 = vector.broadcast %17 : vector<8x1xf32> to vector<8x32xf32>
    %19 = arith.mulf %14, %18 : vector<8x32xf32>
    %20 = arith.truncf %19 : vector<8x32xf32> to vector<8x32xbf16>
    %c0_6 = arith.constant 0 : index
    %c0_7 = arith.constant 0 : index
    %21 = vector.load %arg2[%c0_6, %c0_7] : memref<32x96xbf16, #tpu.memory_space<vmem>>, vector<32x96xbf16>
    %cst_8 = arith.constant dense<0.000000e+00> : vector<8x96xf32>
    %22 = tpu.matmul %20, %21, %cst_8 {dimension_numbers = #tpu.dot_dimension_numbers<[1], [0], [0], [1], [0, 0, 1, 1], [], []>} : vector<8x32xbf16>, vector<32x96xbf16>, vector<8x96xf32> -> vector<8x96xf32>
    %c0_9 = arith.constant 0 : index
    %c0_10 = arith.constant 0 : index
    %23 = vector.load %arg3[%c0_9, %c0_10] : memref<1x96xf32, #tpu.memory_space<vmem>>, vector<1x96xf32>
    %24 = vector.broadcast %23 : vector<1x96xf32> to vector<8x96xf32>
    %25 = arith.addf %22, %24 : vector<8x96xf32>
    %26 = vector.extract_strided_slice %25 {offsets = [0, 0], sizes = [8, 32], strides = [1, 1]} : vector<8x96xf32> to vector<8x32xf32>
    %27 = arith.truncf %26 : vector<8x32xf32> to vector<8x32xbf16>
    %28 = vector.extract_strided_slice %25 {offsets = [0, 32], sizes = [8, 32], strides = [1, 1]} : vector<8x96xf32> to vector<8x32xf32>
    %29 = arith.truncf %28 : vector<8x32xf32> to vector<8x32xbf16>
    %30 = vector.extract_strided_slice %25 {offsets = [0, 64], sizes = [8, 32], strides = [1, 1]} : vector<8x96xf32> to vector<8x32xf32>
    %31 = arith.truncf %30 : vector<8x32xf32> to vector<8x32xbf16>
    %32 = vector.extract_strided_slice %27 {offsets = [0, 0], sizes = [8, 8], strides = [1, 1]} : vector<8x32xbf16> to vector<8x8xbf16>
    %33 = vector.extract_strided_slice %29 {offsets = [0, 0], sizes = [8, 8], strides = [1, 1]} : vector<8x32xbf16> to vector<8x8xbf16>
    %34 = vector.extract_strided_slice %31 {offsets = [0, 0], sizes = [8, 8], strides = [1, 1]} : vector<8x32xbf16> to vector<8x8xbf16>
    %cst_11 = arith.constant dense<0.000000e+00> : vector<8x8xf32>
    %35 = tpu.matmul %32, %33, %cst_11 {dimension_numbers = #tpu.dot_dimension_numbers<[1], [1], [0], [0], [0, 0, 1, 0], [], []>} : vector<8x8xbf16>, vector<8x8xbf16>, vector<8x8xf32> -> vector<8x8xf32>
    %cst_12 = arith.constant dense<0xFF800000> : vector<8xf32>
    %36 = vector.multi_reduction <maximumf>, %35, %cst_12 [1] : vector<8x8xf32> to vector<8xf32>
    %37 = vector.shape_cast %36 : vector<8xf32> to vector<8x1xf32>
    %38 = vector.broadcast %37 : vector<8x1xf32> to vector<8x8xf32>
    %39 = arith.subf %35, %38 : vector<8x8xf32>
    %40 = math.exp %39 : vector<8x8xf32>
    %cst_13 = arith.constant dense<0.000000e+00> : vector<8xf32>
    %41 = vector.multi_reduction <add>, %40, %cst_13 [1] : vector<8x8xf32> to vector<8xf32>
    %42 = vector.shape_cast %41 : vector<8xf32> to vector<8x1xf32>
    %43 = tpu.reciprocal %42 {approx = true} : vector<8x1xf32> -> vector<8x1xf32>
    %44 = vector.broadcast %43 : vector<8x1xf32> to vector<8x8xf32>
    %45 = arith.mulf %40, %44 : vector<8x8xf32>
    %46 = arith.truncf %45 : vector<8x8xf32> to vector<8x8xbf16>
    %cst_14 = arith.constant dense<0.000000e+00> : vector<8x8xf32>
    %47 = tpu.matmul %46, %34, %cst_14 {dimension_numbers = #tpu.dot_dimension_numbers<[1], [0], [0], [1], [0, 0, 1, 1], [], []>} : vector<8x8xbf16>, vector<8x8xbf16>, vector<8x8xf32> -> vector<8x8xf32>
    %c0_15 = arith.constant 0 : index
    %c0_16 = arith.constant 0 : index
    %48 = vector.load %arg11[%c0_15, %c0_16] : memref<8x32xf32, #tpu.memory_space<vmem>>, vector<8x8xf32>
    tpu.vector_store %arg11[%c0_15, %c0_16], %47 {strides = array<i32>} : memref<8x32xf32, #tpu.memory_space<vmem>>, vector<8x8xf32>,
    %49 = vector.extract_strided_slice %27 {offsets = [0, 8], sizes = [8, 8], strides = [1, 1]} : vector<8x32xbf16> to vector<8x8xbf16>
    %50 = vector.extract_strided_slice %29 {offsets = [0, 8], sizes = [8, 8], strides = [1, 1]} : vector<8x32xbf16> to vector<8x8xbf16>
    %51 = vector.extract_strided_slice %31 {offsets = [0, 8], sizes = [8, 8], strides = [1, 1]} : vector<8x32xbf16> to vector<8x8xbf16>
    %cst_17 = arith.constant dense<0.000000e+00> : vector<8x8xf32>
    %52 = tpu.matmul %49, %50, %cst_17 {dimension_numbers = #tpu.dot_dimension_numbers<[1], [1], [0], [0], [0, 0, 1, 0], [], []>} : vector<8x8xbf16>, vector<8x8xbf16>, vector<8x8xf32> -> vector<8x8xf32>
    %cst_18 = arith.constant dense<0xFF800000> : vector<8xf32>
    %53 = vector.multi_reduction <maximumf>, %52, %cst_18 [1] : vector<8x8xf32> to vector<8xf32>
    %54 = vector.shape_cast %53 : vector<8xf32> to vector<8x1xf32>
    %55 = vector.broadcast %54 : vector<8x1xf32> to vector<8x8xf32>
    %56 = arith.subf %52, %55 : vector<8x8xf32>
    %57 = math.exp %56 : vector<8x8xf32>
    %cst_19 = arith.constant dense<0.000000e+00> : vector<8xf32>
    %58 = vector.multi_reduction <add>, %57, %cst_19 [1] : vector<8x8xf32> to vector<8xf32>
    %59 = vector.shape_cast %58 : vector<8xf32> to vector<8x1xf32>
    %60 = tpu.reciprocal %59 {approx = true} : vector<8x1xf32> -> vector<8x1xf32>
    %61 = vector.broadcast %60 : vector<8x1xf32> to vector<8x8xf32>
    %62 = arith.mulf %57, %61 : vector<8x8xf32>
    %63 = arith.truncf %62 : vector<8x8xf32> to vector<8x8xbf16>
    %cst_20 = arith.constant dense<0.000000e+00> : vector<8x8xf32>
    %64 = tpu.matmul %63, %51, %cst_20 {dimension_numbers = #tpu.dot_dimension_numbers<[1], [0], [0], [1], [0, 0, 1, 1], [], []>} : vector<8x8xbf16>, vector<8x8xbf16>, vector<8x8xf32> -> vector<8x8xf32>
    %c0_21 = arith.constant 0 : index
    %c8 = arith.constant 8 : index
    %65 = vector.load %arg11[%c0_21, %c8] : memref<8x32xf32, #tpu.memory_space<vmem>>, vector<8x8xf32>
    tpu.vector_store %arg11[%c0_21, %c8], %64 {strides = array<i32>} : memref<8x32xf32, #tpu.memory_space<vmem>>, vector<8x8xf32>,
    %66 = vector.extract_strided_slice %27 {offsets = [0, 16], sizes = [8, 8], strides = [1, 1]} : vector<8x32xbf16> to vector<8x8xbf16>
    %67 = vector.extract_strided_slice %29 {offsets = [0, 16], sizes = [8, 8], strides = [1, 1]} : vector<8x32xbf16> to vector<8x8xbf16>
    %68 = vector.extract_strided_slice %31 {offsets = [0, 16], sizes = [8, 8], strides = [1, 1]} : vector<8x32xbf16> to vector<8x8xbf16>
    %cst_22 = arith.constant dense<0.000000e+00> : vector<8x8xf32>
    %69 = tpu.matmul %66, %67, %cst_22 {dimension_numbers = #tpu.dot_dimension_numbers<[1], [1], [0], [0], [0, 0, 1, 0], [], []>} : vector<8x8xbf16>, vector<8x8xbf16>, vector<8x8xf32> -> vector<8x8xf32>
    %cst_23 = arith.constant dense<0xFF800000> : vector<8xf32>
    %70 = vector.multi_reduction <maximumf>, %69, %cst_23 [1] : vector<8x8xf32> to vector<8xf32>
    %71 = vector.shape_cast %70 : vector<8xf32> to vector<8x1xf32>
    %72 = vector.broadcast %71 : vector<8x1xf32> to vector<8x8xf32>
    %73 = arith.subf %69, %72 : vector<8x8xf32>
    %74 = math.exp %73 : vector<8x8xf32>
    %cst_24 = arith.constant dense<0.000000e+00> : vector<8xf32>
    %75 = vector.multi_reduction <add>, %74, %cst_24 [1] : vector<8x8xf32> to vector<8xf32>
    %76 = vector.shape_cast %75 : vector<8xf32> to vector<8x1xf32>
    %77 = tpu.reciprocal %76 {approx = true} : vector<8x1xf32> -> vector<8x1xf32>
    %78 = vector.broadcast %77 : vector<8x1xf32> to vector<8x8xf32>
    %79 = arith.mulf %74, %78 : vector<8x8xf32>
    %80 = arith.truncf %79 : vector<8x8xf32> to vector<8x8xbf16>
    %cst_25 = arith.constant dense<0.000000e+00> : vector<8x8xf32>
    %81 = tpu.matmul %80, %68, %cst_25 {dimension_numbers = #tpu.dot_dimension_numbers<[1], [0], [0], [1], [0, 0, 1, 1], [], []>} : vector<8x8xbf16>, vector<8x8xbf16>, vector<8x8xf32> -> vector<8x8xf32>
    %c0_26 = arith.constant 0 : index
    %c16 = arith.constant 16 : index
    %82 = vector.load %arg11[%c0_26, %c16] : memref<8x32xf32, #tpu.memory_space<vmem>>, vector<8x8xf32>
    tpu.vector_store %arg11[%c0_26, %c16], %81 {strides = array<i32>} : memref<8x32xf32, #tpu.memory_space<vmem>>, vector<8x8xf32>,
    %83 = vector.extract_strided_slice %27 {offsets = [0, 24], sizes = [8, 8], strides = [1, 1]} : vector<8x32xbf16> to vector<8x8xbf16>
    %84 = vector.extract_strided_slice %29 {offsets = [0, 24], sizes = [8, 8], strides = [1, 1]} : vector<8x32xbf16> to vector<8x8xbf16>
    %85 = vector.extract_strided_slice %31 {offsets = [0, 24], sizes = [8, 8], strides = [1, 1]} : vector<8x32xbf16> to vector<8x8xbf16>
    %cst_27 = arith.constant dense<0.000000e+00> : vector<8x8xf32>
    %86 = tpu.matmul %83, %84, %cst_27 {dimension_numbers = #tpu.dot_dimension_numbers<[1], [1], [0], [0], [0, 0, 1, 0], [], []>} : vector<8x8xbf16>, vector<8x8xbf16>, vector<8x8xf32> -> vector<8x8xf32>
    %cst_28 = arith.constant dense<0xFF800000> : vector<8xf32>
    %87 = vector.multi_reduction <maximumf>, %86, %cst_28 [1] : vector<8x8xf32> to vector<8xf32>
    %88 = vector.shape_cast %87 : vector<8xf32> to vector<8x1xf32>
    %89 = vector.broadcast %88 : vector<8x1xf32> to vector<8x8xf32>
    %90 = arith.subf %86, %89 : vector<8x8xf32>
    %91 = math.exp %90 : vector<8x8xf32>
    %cst_29 = arith.constant dense<0.000000e+00> : vector<8xf32>
    %92 = vector.multi_reduction <add>, %91, %cst_29 [1] : vector<8x8xf32> to vector<8xf32>
    %93 = vector.shape_cast %92 : vector<8xf32> to vector<8x1xf32>
    %94 = tpu.reciprocal %93 {approx = true} : vector<8x1xf32> -> vector<8x1xf32>
    %95 = vector.broadcast %94 : vector<8x1xf32> to vector<8x8xf32>
    %96 = arith.mulf %91, %95 : vector<8x8xf32>
    %97 = arith.truncf %96 : vector<8x8xf32> to vector<8x8xbf16>
    %cst_30 = arith.constant dense<0.000000e+00> : vector<8x8xf32>
    %98 = tpu.matmul %97, %85, %cst_30 {dimension_numbers = #tpu.dot_dimension_numbers<[1], [0], [0], [1], [0, 0, 1, 1], [], []>} : vector<8x8xbf16>, vector<8x8xbf16>, vector<8x8xf32> -> vector<8x8xf32>
    %c0_31 = arith.constant 0 : index
    %c24 = arith.constant 24 : index
    %99 = vector.load %arg11[%c0_31, %c24] : memref<8x32xf32, #tpu.memory_space<vmem>>, vector<8x8xf32>
    tpu.vector_store %arg11[%c0_31, %c24], %98 {strides = array<i32>} : memref<8x32xf32, #tpu.memory_space<vmem>>, vector<8x8xf32>,
    %c0_32 = arith.constant 0 : index
    %c0_33 = arith.constant 0 : index
    %100 = vector.load %arg11[%c0_32, %c0_33] : memref<8x32xf32, #tpu.memory_space<vmem>>, vector<8x32xf32>
    %101 = arith.truncf %100 : vector<8x32xf32> to vector<8x32xbf16>
    %c0_34 = arith.constant 0 : index
    %c0_35 = arith.constant 0 : index
    %102 = vector.load %arg4[%c0_34, %c0_35] : memref<32x32xbf16, #tpu.memory_space<vmem>>, vector<32x32xbf16>
    %cst_36 = arith.constant dense<0.000000e+00> : vector<8x32xf32>
    %103 = tpu.matmul %101, %102, %cst_36 {dimension_numbers = #tpu.dot_dimension_numbers<[1], [0], [0], [1], [0, 0, 1, 1], [], []>} : vector<8x32xbf16>, vector<32x32xbf16>, vector<8x32xf32> -> vector<8x32xf32>
    %c0_37 = arith.constant 0 : index
    %c0_38 = arith.constant 0 : index
    %104 = vector.load %arg5[%c0_37, %c0_38] : memref<1x32xf32, #tpu.memory_space<vmem>>, vector<1x32xf32>
    %105 = vector.broadcast %104 : vector<1x32xf32> to vector<8x32xf32>
    %106 = arith.addf %103, %105 : vector<8x32xf32>
    %107 = arith.addf %1, %106 : vector<8x32xf32>
    %cst_39 = arith.constant dense<0.000000e+00> : vector<8xf32>
    %108 = vector.multi_reduction <add>, %107, %cst_39 [1] : vector<8x32xf32> to vector<8xf32>
    %109 = vector.shape_cast %108 : vector<8xf32> to vector<8x1xf32>
    %cst_40 = arith.constant 3.200000e+01 : f32
    %110 = vector.broadcast %cst_40 : f32 to vector<8x1xf32>
    %111 = arith.divf %109, %110 : vector<8x1xf32>
    %112 = vector.broadcast %111 : vector<8x1xf32> to vector<8x32xf32>
    %113 = arith.subf %107, %112 : vector<8x32xf32>
    %114 = arith.mulf %113, %113 : vector<8x32xf32>
    %cst_41 = arith.constant dense<0.000000e+00> : vector<8xf32>
    %115 = vector.multi_reduction <add>, %114, %cst_41 [1] : vector<8x32xf32> to vector<8xf32>
    %116 = vector.shape_cast %115 : vector<8xf32> to vector<8x1xf32>
    %cst_42 = arith.constant 3.200000e+01 : f32
    %117 = vector.broadcast %cst_42 : f32 to vector<8x1xf32>
    %118 = arith.divf %116, %117 : vector<8x1xf32>
    %119 = vector.broadcast %111 : vector<8x1xf32> to vector<8x32xf32>
    %120 = arith.subf %107, %119 : vector<8x32xf32>
    %cst_43 = arith.constant 9.99999974E-6 : f32
    %121 = vector.broadcast %cst_43 : f32 to vector<8x1xf32>
    %122 = arith.addf %118, %121 : vector<8x1xf32>
    %123 = math.rsqrt %122 : vector<8x1xf32>
    %124 = vector.broadcast %123 : vector<8x1xf32> to vector<8x32xf32>
    %125 = arith.mulf %120, %124 : vector<8x32xf32>
    %126 = arith.truncf %125 : vector<8x32xf32> to vector<8x32xbf16>
    %c0_44 = arith.constant 0 : index
    %c0_45 = arith.constant 0 : index
    %127 = vector.load %arg6[%c0_44, %c0_45] : memref<32x128xbf16, #tpu.memory_space<vmem>>, vector<32x128xbf16>
    %cst_46 = arith.constant dense<0.000000e+00> : vector<8x128xf32>
    %128 = tpu.matmul %126, %127, %cst_46 {dimension_numbers = #tpu.dot_dimension_numbers<[1], [0], [0], [1], [0, 0, 1, 1], [], []>} : vector<8x32xbf16>, vector<32x128xbf16>, vector<8x128xf32> -> vector<8x128xf32>
    %c0_47 = arith.constant 0 : index
    %c0_48 = arith.constant 0 : index
    %129 = vector.load %arg7[%c0_47, %c0_48] : memref<1x128xf32, #tpu.memory_space<vmem>>, vector<1x128xf32>
    %130 = vector.broadcast %129 : vector<1x128xf32> to vector<8x128xf32>
    %131 = arith.addf %128, %130 : vector<8x128xf32>
    %cst_49 = arith.constant 0.000000e+00 : f32
    %132 = vector.broadcast %cst_49 : f32 to vector<8x128xf32>
    %133 = arith.maximumf %131, %132 : vector<8x128xf32>
    %134 = arith.truncf %133 : vector<8x128xf32> to vector<8x128xbf16>
    %c0_50 = arith.constant 0 : index
    %c0_51 = arith.constant 0 : index
    %135 = vector.load %arg8[%c0_50, %c0_51] : memref<128x32xbf16, #tpu.memory_space<vmem>>, vector<128x32xbf16>
    %cst_52 = arith.constant dense<0.000000e+00> : vector<8x32xf32>
    %136 = tpu.matmul %134, %135, %cst_52 {dimension_numbers = #tpu.dot_dimension_numbers<[1], [0], [0], [1], [0, 0, 1, 1], [], []>} : vector<8x128xbf16>, vector<128x32xbf16>, vector<8x32xf32> -> vector<8x32xf32>
    %c0_53 = arith.constant 0 : index
    %c0_54 = arith.constant 0 : index
    %137 = vector.load %arg9[%c0_53, %c0_54] : memref<1x32xf32, #tpu.memory_space<vmem>>, vector<1x32xf32>
    %138 = vector.broadcast %137 : vector<1x32xf32> to vector<8x32xf32>
    %139 = arith.addf %136, %138 : vector<8x32xf32>
    %140 = arith.addf %107, %139 : vector<8x32xf32>
    %c0_55 = arith.constant 0 : index
    %c0_56 = arith.constant 0 : index
    %c0_57 = arith.constant 0 : index
    %141 = vector.load %arg10[%c0_55, %c0_56, %c0_57] : memref<1x8x32xf32, #tpu.memory_space<vmem>>, vector<1x8x32xf32>
    %142 = vector.shape_cast %141 : vector<1x8x32xf32> to vector<8x32xf32>
    %143 = vector.shape_cast %140 : vector<8x32xf32> to vector<1x8x32xf32>
    tpu.vector_store %arg10[%c0_55, %c0_56, %c0_57], %143 {strides = array<i32>} : memref<1x8x32xf32, #tpu.memory_space<vmem>>, vector<1x8x32xf32>,
    return
  }
  func.func @transform_0(%arg0: i32) -> (i32, i32, i32) {
    %c0_i32 = arith.constant 0 : i32
    %c0_i32_0 = arith.constant 0 : i32
    %c0_i32_1 = arith.constant 0 : i32
    return %arg0, %c0_i32, %c0_i32_0 : i32, i32, i32
  }
  func.func @transform_1(%arg0: i32) -> (i32, i32) {
    %c0_i32 = arith.constant 0 : i32
    %c0_i32_0 = arith.constant 0 : i32
    %c0_i32_1 = arith.constant 0 : i32
    return %c0_i32, %c0_i32_0 : i32, i32
  }
  func.func @transform_2(%arg0: i32) -> (i32, i32) {
    %c0_i32 = arith.constant 0 : i32
    %c0_i32_0 = arith.constant 0 : i32
    %c0_i32_1 = arith.constant 0 : i32
    return %c0_i32, %c0_i32_0 : i32, i32
  }
  func.func @transform_3(%arg0: i32) -> (i32, i32) {
    %c0_i32 = arith.constant 0 : i32
    %c0_i32_0 = arith.constant 0 : i32
    %c0_i32_1 = arith.constant 0 : i32
    return %c0_i32, %c0_i32_0 : i32, i32
  }
  func.func @transform_4(%arg0: i32) -> (i32, i32) {
    %c0_i32 = arith.constant 0 : i32
    %c0_i32_0 = arith.constant 0 : i32
    %c0_i32_1 = arith.constant 0 : i32
    return %c0_i32, %c0_i32_0 : i32, i32
  }
  func.func @transform_5(%arg0: i32) -> (i32, i32) {
    %c0_i32 = arith.constant 0 : i32
    %c0_i32_0 = arith.constant 0 : i32
    %c0_i32_1 = arith.constant 0 : i32
    return %c0_i32, %c0_i32_0 : i32, i32
  }
  func.func @transform_6(%arg0: i32) -> (i32, i32) {
    %c0_i32 = arith.constant 0 : i32
    %c0_i32_0 = arith.constant 0 : i32
    %c0_i32_1 = arith.constant 0 : i32
    return %c0_i32, %c0_i32_0 : i32, i32
  }
  func.func @transform_7(%arg0: i32) -> (i32, i32) {
    %c0_i32 = arith.constant 0 : i32
    %c0_i32_0 = arith.constant 0 : i32
    %c0_i32_1 = arith.constant 0 : i32
    return %c0_i32, %c0_i32_0 : i32, i32
  }
  func.func @transform_8(%arg0: i32) -> (i32, i32) {
    %c0_i32 = arith.constant 0 : i32
    %c0_i32_0 = arith.constant 0 : i32
    %c0_i32_1 = arith.constant 0 : i32
    return %c0_i32, %c0_i32_0 : i32, i32
  }
  func.func @transform_9(%arg0: i32) -> (i32, i32, i32) {
    %c0_i32 = arith.constant 0 : i32
    %c0_i32_0 = arith.constant 0 : i32
    %c0_i32_1 = arith.constant 0 : i32
    return %arg0, %c0_i32, %c0_i32_0 : i32, i32, i32
  }
}

</mosaic_0001>

<llo_original>
// kernel: tpu_custom_call.1
$region0: #{tpu_custom_call.1}
  #allocation0 [shape = 'u32[]', space=smem, size = 0x4, offset = 0x4, fixed_abs, tag = 'smem constant byte address 0x4 - core index']
  #allocation1 [shape = 'u32[144,128]{1,0:T(1,128)}', space=vmem, size = 0x12000, scoped, tag = 'internal scratch']
  #allocation2 [shape = 'f32[8,32]{1,0:T(8,128)}', space=vmem, size = 0x1000, scoped, tag = 'scratch operand']
  %s0 = inlined_call_operand.vmem [shape: f32[2,8,32], index: 0, kind: input, shape index: {}]
  %s1 = inlined_call_operand.vmem [shape: bf16[32,96], index: 1, kind: input, shape index: {}]
  %s2 = inlined_call_operand.vmem [shape: f32[1,96], index: 2, kind: input, shape index: {}]
  %s3 = inlined_call_operand.vmem [shape: bf16[32,32], index: 3, kind: input, shape index: {}]
  %s4 = inlined_call_operand.vmem [shape: f32[1,32], index: 4, kind: input, shape index: {}]
  %s5 = inlined_call_operand.vmem [shape: bf16[32,128], index: 5, kind: input, shape index: {}]
  %s6 = inlined_call_operand.vmem [shape: f32[1,128], index: 6, kind: input, shape index: {}]
  %s7 = inlined_call_operand.vmem [shape: bf16[128,32], index: 7, kind: input, shape index: {}]
  %s8 = inlined_call_operand.vmem [shape: f32[1,32], index: 8, kind: input, shape index: {}]
  %s9 = inlined_call_operand.hbm [shape: f32[2,8,32], index: 9, kind: output, shape index: {}]
  %s10 = sld [smem:[#allocation0]]
  $region69: #{tpu_custom_call.1} parent=0
    _
  %s12 = ssub.s32 1, %s10
  %s13 = scalar_select 0, %s12, %s10
  $region1: #{tpu_custom_call.1} parent=0
    #allocation3 [shape = 'u8[8192]{0}', space=vmem, size = 0x2000, scoped, tag = 'output window, operand 0']
    #allocation4 [shape = 's32[2]{0}', space=sflag, size = 0x8, scoped, tag = 'scoped memory for tpu_custom_call.1']
    %14 = vsyncpa [#allocation4], 0
    %s15 = scalar_lea.sflag [#allocation4], 1
    %16 = vsyncpa %s15, 0
    loop: start=0, step=1, limit=4
    $region2: #{tpu_custom_call.1} parent=1 // loop_pre_header
      _
    $region3: #{tpu_custom_call.1} parent=1 // loop_header
      %s18 = sphi 0, %s22
      %p19 = scmp.ge.s32.totalorder %s18, 4
      %s28 = sphi 0, %s30
      %s31 = sphi 0, %s28
      %s32 = sphi 0, %s31
      %s48 = sphi 0, %s32
      %s52 = sphi 0, %s52
      %s54 = sphi 0, %s52
      %s55 = sphi 0, %s54
      %s69 = sphi 0, %s55
      %s73 = sphi 0, %s73
      %s75 = sphi 0, %s73
      %s76 = sphi 0, %s75
      %s90 = sphi 0, %s76
      %s94 = sphi 0, %s94
      %s96 = sphi 0, %s94
      %s97 = sphi 0, %s96
      %s111 = sphi 0, %s97
      %s115 = sphi 0, %s115
      %s117 = sphi 0, %s115
      %s118 = sphi 0, %s117
      %s132 = sphi 0, %s118
      %s136 = sphi 0, %s136
      %s138 = sphi 0, %s136
      %s139 = sphi 0, %s138
      %s153 = sphi 0, %s139
      %s157 = sphi 0, %s157
      %s159 = sphi 0, %s157
      %s160 = sphi 0, %s159
      %s174 = sphi 0, %s160
      %s178 = sphi 0, %s178
      %s180 = sphi 0, %s178
      %s181 = sphi 0, %s180
      %s195 = sphi 0, %s181
      %s199 = sphi 0, %s199
      %s201 = sphi 0, %s199
      %s202 = sphi 0, %s201
      %s216 = sphi 0, %s202
      %s222 = sphi 0, %s224
      %s225 = sphi 0, %s222
      %s226 = sphi 0, %s225
      %s242 = sphi 0, %s226
    $region4: #{tpu_custom_call.1} parent=1 // loop_header_branch
      %21 = sbr.rel (%p19) target = $region8
    $region5: #{tpu_custom_call.1} parent=1 // loop_body
      %s23 = ssub.s32 %s18, 1
      %s24 = ssub.s32 %s18, 2
      %s25 = sadd.s32 %s18, 1
      %s26 = ssub.s32 %s18, %s25
      %p27 = scmp.eq.s32.totalorder %s26, 0
      %s29 = sadd.s32 %s28, 1
      %s30 = scalar_select %p27, %s28, %s29
      %p33 = pneg %p27
      %p34 = scmp.eq.s32.totalorder %s18, 1
      %p35 = por %p33, %p34
      %p36 = scmp.ne.s32.totalorder %s28, %s31
      %p37 = scmp.eq.s32.totalorder %s18, 0
      %p38 = por %p36, %p37
      %p39 = scmp.ne.s32.totalorder %s28, %s31
      %p40 = scmp.eq.s32.totalorder %s23, 1
      %p41 = por %p39, %p40
      %p42 = scmp.ne.s32.totalorder %s31, %s32
      %p43 = scmp.eq.s32.totalorder %s23, 0
      %p44 = por %p42, %p43
      %p45 = scmp.ne.s32.totalorder %s31, %s32
      %p46 = scmp.eq.s32.totalorder %s24, 1
      %p47 = por %p45, %p46
      %p49 = scmp.ne.s32.totalorder %s32, %s48
      %p50 = scmp.eq.s32.totalorder %s24, 0
      %p51 = por %p49, %p50
      %s53 = sadd.s32 %s52, 1
      %p56 = scmp.eq.s32.totalorder %s18, 1
      %p57 = scmp.ne.s32.totalorder %s52, %s54
      %p58 = scmp.eq.s32.totalorder %s18, 0
      %p59 = por %p57, %p58
      %p60 = scmp.ne.s32.totalorder %s52, %s54
      %p61 = scmp.eq.s32.totalorder %s23, 1
      %p62 = por %p60, %p61
      %p63 = scmp.ne.s32.totalorder %s54, %s55
      %p64 = scmp.eq.s32.totalorder %s23, 0
      %p65 = por %p63, %p64
      %p66 = scmp.ne.s32.totalorder %s54, %s55
      %p67 = scmp.eq.s32.totalorder %s24, 1
      %p68 = por %p66, %p67
      %p70 = scmp.ne.s32.totalorder %s55, %s69
      %p71 = scmp.eq.s32.totalorder %s24, 0
      %p72 = por %p70, %p71
      %s74 = sadd.s32 %s73, 1
      %p77 = scmp.eq.s32.totalorder %s18, 1
      %p78 = scmp.ne.s32.totalorder %s73, %s75
      %p79 = scmp.eq.s32.totalorder %s18, 0
      %p80 = por %p78, %p79
      %p81 = scmp.ne.s32.totalorder %s73, %s75
      %p82 = scmp.eq.s32.totalorder %s23, 1
      %p83 = por %p81, %p82
      %p84 = scmp.ne.s32.totalorder %s75, %s76
      %p85 = scmp.eq.s32.totalorder %s23, 0
      %p86 = por %p84, %p85
      %p87 = scmp.ne.s32.totalorder %s75, %s76
      %p88 = scmp.eq.s32.totalorder %s24, 1
      %p89 = por %p87, %p88
      %p91 = scmp.ne.s32.totalorder %s76, %s90
      %p92 = scmp.eq.s32.totalorder %s24, 0
      %p93 = por %p91, %p92
      %s95 = sadd.s32 %s94, 1
      %p98 = scmp.eq.s32.totalorder %s18, 1
      %p99 = scmp.ne.s32.totalorder %s94, %s96
      %p100 = scmp.eq.s32.totalorder %s18, 0
      %p101 = por %p99, %p100
      %p102 = scmp.ne.s32.totalorder %s94, %s96
      %p103 = scmp.eq.s32.totalorder %s23, 1
      %p104 = por %p102, %p103
      %p105 = scmp.ne.s32.totalorder %s96, %s97
      %p106 = scmp.eq.s32.totalorder %s23, 0
      %p107 = por %p105, %p106
      %p108 = scmp.ne.s32.totalorder %s96, %s97
      %p109 = scmp.eq.s32.totalorder %s24, 1
      %p110 = por %p108, %p109
      %p112 = scmp.ne.s32.totalorder %s97, %s111
      %p113 = scmp.eq.s32.totalorder %s24, 0
      %p114 = por %p112, %p113
      %s116 = sadd.s32 %s115, 1
      %p119 = scmp.eq.s32.totalorder %s18, 1
      %p120 = scmp.ne.s32.totalorder %s115, %s117
      %p121 = scmp.eq.s32.totalorder %s18, 0
      %p122 = por %p120, %p121
      %p123 = scmp.ne.s32.totalorder %s115, %s117
      %p124 = scmp.eq.s32.totalorder %s23, 1
      %p125 = por %p123, %p124
      %p126 = scmp.ne.s32.totalorder %s117, %s118
      %p127 = scmp.eq.s32.totalorder %s23, 0
      %p128 = por %p126, %p127
      %p129 = scmp.ne.s32.totalorder %s117, %s118
      %p130 = scmp.eq.s32.totalorder %s24, 1
      %p131 = por %p129, %p130
      %p133 = scmp.ne.s32.totalorder %s118, %s132
      %p134 = scmp.eq.s32.totalorder %s24, 0
      %p135 = por %p133, %p134
      %s137 = sadd.s32 %s136, 1
      %p140 = scmp.eq.s32.totalorder %s18, 1
      %p141 = scmp.ne.s32.totalorder %s136, %s138
      %p142 = scmp.eq.s32.totalorder %s18, 0
      %p143 = por %p141, %p142
      %p144 = scmp.ne.s32.totalorder %s136, %s138
      %p145 = scmp.eq.s32.totalorder %s23, 1
      %p146 = por %p144, %p145
      %p147 = scmp.ne.s32.totalorder %s138, %s139
      %p148 = scmp.eq.s32.totalorder %s23, 0
      %p149 = por %p147, %p148
      %p150 = scmp.ne.s32.totalorder %s138, %s139
      %p151 = scmp.eq.s32.totalorder %s24, 1
      %p152 = por %p150, %p151
      %p154 = scmp.ne.s32.totalorder %s139, %s153
      %p155 = scmp.eq.s32.totalorder %s24, 0
      %p156 = por %p154, %p155
      %s158 = sadd.s32 %s157, 1
      %p161 = scmp.eq.s32.totalorder %s18, 1
      %p162 = scmp.ne.s32.totalorder %s157, %s159
      %p163 = scmp.eq.s32.totalorder %s18, 0
      %p164 = por %p162, %p163
      %p165 = scmp.ne.s32.totalorder %s157, %s159
      %p166 = scmp.eq.s32.totalorder %s23, 1
      %p167 = por %p165, %p166
      %p168 = scmp.ne.s32.totalorder %s159, %s160
      %p169 = scmp.eq.s32.totalorder %s23, 0
      %p170 = por %p168, %p169
      %p171 = scmp.ne.s32.totalorder %s159, %s160
      %p172 = scmp.eq.s32.totalorder %s24, 1
      %p173 = por %p171, %p172
      %p175 = scmp.ne.s32.totalorder %s160, %s174
      %p176 = scmp.eq.s32.totalorder %s24, 0
      %p177 = por %p175, %p176
      %s179 = sadd.s32 %s178, 1
      %p182 = scmp.eq.s32.totalorder %s18, 1
      %p183 = scmp.ne.s32.totalorder %s178, %s180
      %p184 = scmp.eq.s32.totalorder %s18, 0
      %p185 = por %p183, %p184
      %p186 = scmp.ne.s32.totalorder %s178, %s180
      %p187 = scmp.eq.s32.totalorder %s23, 1
      %p188 = por %p186, %p187
      %p189 = scmp.ne.s32.totalorder %s180, %s181
      %p190 = scmp.eq.s32.totalorder %s23, 0
      %p191 = por %p189, %p190
      %p192 = scmp.ne.s32.totalorder %s180, %s181
      %p193 = scmp.eq.s32.totalorder %s24, 1
      %p194 = por %p192, %p193
      %p196 = scmp.ne.s32.totalorder %s181, %s195
      %p197 = scmp.eq.s32.totalorder %s24, 0
      %p198 = por %p196, %p197
      %s200 = sadd.s32 %s199, 1
      %p203 = scmp.eq.s32.totalorder %s18, 1
      %p204 = scmp.ne.s32.totalorder %s199, %s201
      %p205 = scmp.eq.s32.totalorder %s18, 0
      %p206 = por %p204, %p205
      %p207 = scmp.ne.s32.totalorder %s199, %s201
      %p208 = scmp.eq.s32.totalorder %s23, 1
      %p209 = por %p207, %p208
      %p210 = scmp.ne.s32.totalorder %s201, %s202
      %p211 = scmp.eq.s32.totalorder %s23, 0
      %p212 = por %p210, %p211
      %p213 = scmp.ne.s32.totalorder %s201, %s202
      %p214 = scmp.eq.s32.totalorder %s24, 1
      %p215 = por %p213, %p214
      %p217 = scmp.ne.s32.totalorder %s202, %s216
      %p218 = scmp.eq.s32.totalorder %s24, 0
      %p219 = por %p217, %p218
      %s220 = ssub.s32 %s18, %s25
      %p221 = scmp.eq.s32.totalorder %s220, 0
      %s223 = sadd.s32 %s222, 1
      %s224 = scalar_select %p221, %s222, %s223
      %p227 = pneg %p221
      %p228 = scmp.eq.s32.totalorder %s18, 1
      %p229 = por %p227, %p228
      %p230 = scmp.ne.s32.totalorder %s222, %s225
      %p231 = scmp.eq.s32.totalorder %s18, 0
      %p232 = por %p230, %p231
      %p233 = scmp.ne.s32.totalorder %s222, %s225
      %p234 = scmp.eq.s32.totalorder %s23, 1
      %p235 = por %p233, %p234
      %p236 = scmp.ne.s32.totalorder %s225, %s226
      %p237 = scmp.eq.s32.totalorder %s23, 0
      %p238 = por %p236, %p237
      %p239 = scmp.ne.s32.totalorder %s225, %s226
      %p240 = scmp.eq.s32.totalorder %s24, 1
      %p241 = por %p239, %p240
      %p243 = scmp.ne.s32.totalorder %s226, %s242
      %p244 = scmp.eq.s32.totalorder %s24, 0
      %p245 = por %p243, %p244
      %p246 = scmp.le.s32.totalorder 1, %s18
      %p247 = scmp.lt.s32.totalorder %s18, 3
      %p248 = pnand %p246, %p247
      %p249 = pneg %p248
      // Predicated region
      $region9: #{tpu_custom_call.1} parent=5 // pred_check
        _
      $region10: #{tpu_custom_call.1} parent=5 // pred_check_branch
        %251 = sbr.rel (%p248) target = $region12
      $region11: #{tpu_custom_call.1} parent=5 // pred_region
        %s252 = ssub.s32 %s18, 1
        // Predicated region
        $region13: #{tpu_custom_call.1} parent=11 // pred_check
          %p253 = pneg %p65
        $region14: #{tpu_custom_call.1} parent=11 // pred_check_branch
          %255 = sbr.rel (%p253) target = $region16
        $region15: #{tpu_custom_call.1} parent=11 // pred_region
          _
        $region16: #{tpu_custom_call.1} parent=11 // pred_fallthru
          _
        // Predicated region
        $region17: #{tpu_custom_call.1} parent=11 // pred_check
          %p256 = pneg %p86
        $region18: #{tpu_custom_call.1} parent=11 // pred_check_branch
          %258 = sbr.rel (%p256) target = $region20
        $region19: #{tpu_custom_call.1} parent=11 // pred_region
          _
        $region20: #{tpu_custom_call.1} parent=11 // pred_fallthru
          _
        // Predicated region
        $region21: #{tpu_custom_call.1} parent=11 // pred_check
          %p259 = pneg %p107
        $region22: #{tpu_custom_call.1} parent=11 // pred_check_branch
          %261 = sbr.rel (%p259) target = $region24
        $region23: #{tpu_custom_call.1} parent=11 // pred_region
          _
        $region24: #{tpu_custom_call.1} parent=11 // pred_fallthru
          _
        // Predicated region
        $region25: #{tpu_custom_call.1} parent=11 // pred_check
          %p262 = pneg %p128
        $region26: #{tpu_custom_call.1} parent=11 // pred_check_branch
          %264 = sbr.rel (%p262) target = $region28
        $region27: #{tpu_custom_call.1} parent=11 // pred_region
          _
        $region28: #{tpu_custom_call.1} parent=11 // pred_fallthru
          _
        // Predicated region
        $region29: #{tpu_custom_call.1} parent=11 // pred_check
          %p265 = pneg %p149
        $region30: #{tpu_custom_call.1} parent=11 // pred_check_branch
          %267 = sbr.rel (%p265) target = $region32
        $region31: #{tpu_custom_call.1} parent=11 // pred_region
          _
        $region32: #{tpu_custom_call.1} parent=11 // pred_fallthru
          _
        // Predicated region
        $region33: #{tpu_custom_call.1} parent=11 // pred_check
          %p268 = pneg %p170
        $region34: #{tpu_custom_call.1} parent=11 // pred_check_branch
          %270 = sbr.rel (%p268) target = $region36
        $region35: #{tpu_custom_call.1} parent=11 // pred_region
          _
        $region36: #{tpu_custom_call.1} parent=11 // pred_fallthru
          _
        // Predicated region
        $region37: #{tpu_custom_call.1} parent=11 // pred_check
          %p271 = pneg %p191
        $region38: #{tpu_custom_call.1} parent=11 // pred_check_branch
          %273 = sbr.rel (%p271) target = $region40
        $region39: #{tpu_custom_call.1} parent=11 // pred_region
          _
        $region40: #{tpu_custom_call.1} parent=11 // pred_fallthru
          _
        // Predicated region
        $region41: #{tpu_custom_call.1} parent=11 // pred_check
          %p274 = pneg %p212
        $region42: #{tpu_custom_call.1} parent=11 // pred_check_branch
          %276 = sbr.rel (%p274) target = $region44
        $region43: #{tpu_custom_call.1} parent=11 // pred_region
          _
        $region44: #{tpu_custom_call.1} parent=11 // pred_fallthru
          _
      $region12: #{tpu_custom_call.1} parent=5 // pred_fallthru
        _
      %p277 = scmp.lt.s32.totalorder %s18, 2
      // Predicated region
      $region45: #{tpu_custom_call.1} parent=5 // pred_check
        %p278 = pneg %p277
      $region46: #{tpu_custom_call.1} parent=5 // pred_check_branch
        %280 = sbr.rel (%p278) target = $region48
      $region47: #{tpu_custom_call.1} parent=5 // pred_region
        // Predicated region
        $region49: #{tpu_custom_call.1} parent=47 // pred_check
          %p281 = pneg %p38
        $region50: #{tpu_custom_call.1} parent=47 // pred_check_branch
          %283 = sbr.rel (%p281) target = $region52
        $region51: #{tpu_custom_call.1} parent=47 // pred_region
          %p284 = scmp.lt.s32.totalorder %s18, 1
          %s285 = scalar_select %p284, %s18, 1
          %s286 = smul.addr %s285, 8
          %s287 = scalar_lea.vmem %s0, %s286
        $region52: #{tpu_custom_call.1} parent=47 // pred_fallthru
          _
      $region48: #{tpu_custom_call.1} parent=5 // pred_fallthru
        _
      %p288 = scmp.le.s32.totalorder 1, %s18
      %p289 = scmp.lt.s32.totalorder %s18, 3
      %p290 = pnand %p288, %p289
      %p291 = pneg %p290
      // Predicated region
      $region53: #{tpu_custom_call.1} parent=5 // pred_check
        _
      $region54: #{tpu_custom_call.1} parent=5 // pred_check_branch
        %293 = sbr.rel (%p290) target = $region56
      $region55: #{tpu_custom_call.1} parent=5 // pred_region
        %s294 = ssub.s32 %s18, 1
        %p295 = scmp.lt.s32.totalorder %s23, 1
        %s296 = scalar_select %p295, %s23, 1
        %s297 = smul.addr %s296, 8
        %s298 = scalar_lea.vmem %s0, %s297
        %p299 = pneg %p44
        %p300 = pneg %p41
        %p301 = pneg %p65
        %p302 = pneg %p62
        %p303 = pneg %p86
        %p304 = pneg %p83
        %p305 = pneg %p107
        %p306 = pneg %p104
        %p307 = pneg %p128
        %p308 = pneg %p125
        %p309 = pneg %p149
        %p310 = pneg %p146
        %p311 = pneg %p170
        %p312 = pneg %p167
        %p313 = pneg %p191
        %p314 = pneg %p188
        %p315 = pneg %p212
        %p316 = pneg %p209
        %p317 = pneg %p238
        %p318 = pneg %p235
        %s319 = sand.u32 %s225, 1
        %s320 = scalar_lea.sflag [#allocation4], %s319
        %s321 = sand.u32 %s225, 1
        %s322 = smul.addr %s321, 8
        %s323 = scalar_lea.vmem [#allocation3], %s322
        %p324 = scmp.lt.s32.totalorder %s23, 1
        %s325 = scalar_select %p324, %s23, 1
        %s326 = smul.addr %s325, 8
        %s327 = scalar_lea.vmem %s0, %s326
        %v329 = vld [vmem:[%s327] sm:$0xff]
        %vm330 = vcmask 261120
        %v331 = vsel %vm330, %v329, 0.0
        %332 = vadd.xlane.f32.xlu0 %v331
        %v333 = vpop.xlane.xlu0 %332
        %v334 = vrcp.pop 32.0
        %v335 = vmul.f32 %v333, %v334
        %v336 = vsub.f32 %v329, %v335
        %v337 = vmul.f32 %v336, %v336
        %v338 = vsel %vm330, %v337, 0.0
        %339 = vadd.xlane.f32.xlu0 %v338
        %v340 = vpop.xlane.xlu0 %339
        %v341 = vmul.f32 %v340, %v334
        %v342 = vadd.f32 %v341, 1e-05
        %v343 = vrsqrt.pop %v342
        %v344 = vmul.f32 %v336, %v343
        %v345 = vpack.c.bf16 %v344, %v344
        %v346 = vld [vmem:[%s1] sm:$0xf]
        %v347 = vld [vmem:[%s1 + $0x4] sm:$0xf]
        %v348 = vld [vmem:[%s1 + $0x8] sm:$0xf]
        %v349 = vld [vmem:[%s1 + $0xc] sm:$0xf]
        %v350 = vld [vmem:[%s2] sm:$0x1]
        %v352 = vlaneseq
        %v353 = vshrl.u32 %v352, 7
        %v354 = vsub.s32 0, %v353
        %v355 = vrot.slane %v350, %v354
        %v361 = vunpack.c.l.b16 %v346
        %v362 = vunpack.c.l.b16 %v347
        %v363 = vunpack.c.l.b16 %v348
        %v364 = vunpack.c.l.b16 %v349
        %v365 = vpack.c.b16 %v362, %v361
        %v366 = vpack.c.b16 %v364, %v363
        %v370 = vsel %vm330, %v345, 0
        %372 = vmatprep.subr.bf16.mxu0 0
        %373 = vmatpush1.bf16.msra.mxu0 %v365
        %374 = vmatprep.subr.bf16.mxu0 0
        %375 = vmatpush1.bf16.msra.mxu0 %v366
        %376 = vmatprep.subr.bf16.mxu0 0
        %377 = vmatpush1.bf16.msra.mxu0 0
        %378 = vmatprep.subr.bf16.mxu0 0
        %379 = vmatpush1.bf16.msra.mxu0 0
        %380 = vmatprep.subr.bf16.mxu0 0
        %381 = vmatpush1.bf16.msra.mxu0 0
        %382 = vmatprep.subr.bf16.mxu0 0
        %383 = vmatpush1.bf16.msra.mxu0 0
        %384 = vmatprep.subr.bf16.mxu0 0
        %385 = vmatpush1.bf16.msra.mxu0 0
        %386 = vmatprep.subr.bf16.mxu0 0
        %387 = vmatpush1.bf16.msra.mxu0 0
        %388 = vmatprep.subr.bf16.mxu0 0
        %389 = vmatpush1.bf16.msra.mxu0 0
        %390 = vmatprep.subr.bf16.mxu0 0
        %391 = vmatpush1.bf16.msra.mxu0 0
        %392 = vmatprep.subr.bf16.mxu0 0
        %393 = vmatpush1.bf16.msra.mxu0 0
        %394 = vmatprep.subr.bf16.mxu0 0
        %395 = vmatpush1.bf16.msra.mxu0 0
        %396 = vmatprep.subr.bf16.mxu0 0
        %397 = vmatpush1.bf16.msra.mxu0 0
        %398 = vmatprep.subr.bf16.mxu0 0
        %399 = vmatpush1.bf16.msra.mxu0 0
        %400 = vmatprep.subr.bf16.mxu0 0
        %401 = vmatpush1.bf16.msra.mxu0 0
        %402 = vmatprep.subr.bf16.mxu0 0
        %403 = vmatpush1.bf16.msra.mxu0 0
        %404 = vmatprep.mubr.bf16.mxu0 0
        %405 = vmatmul.mubr.bf16.gmra.mrb[0].mxu0 %v370
        %v406 = vpop.f32.mrb[0].mxu0
        %v407 = vadd.f32 %v355, %v406
        %v408 = vpop.f32.mrb[0].mxu0
        %v409 = vpop.f32.mrb[0].mxu0
        %v410 = vpop.f32.mrb[0].mxu0
        %411 = vdwg.mxu0
        %v412 = vpack.c.bf16 %v407, %v407
        %414 = vrot.lane.b32.xlu0 %v412, 96
        %v415 = vpop.permute.xlu0 %414
        %vm416 = vcmask 64512
        %v418 = vsel %vm416, %v412, 0
        %v421 = vsel %vm416, %v415, 0
        %423 = vmatprep.subr.bf16.mxu0 0
        %424 = vmatpush1.bf16.xpose.msra.mxu0 %v421
        %425 = vmatprep.subr.bf16.mxu0 0
        %426 = vmatpush1.bf16.xpose.msra.mxu0 0
        %427 = vmatprep.subr.bf16.mxu0 0
        %428 = vmatpush1.bf16.xpose.msra.mxu0 0
        %429 = vmatprep.subr.bf16.mxu0 0
        %430 = vmatpush1.bf16.xpose.msra.mxu0 0
        %431 = vmatprep.subr.bf16.mxu0 0
        %432 = vmatpush1.bf16.xpose.msra.mxu0 0
        %433 = vmatprep.subr.bf16.mxu0 0
        %434 = vmatpush1.bf16.xpose.msra.mxu0 0
        %435 = vmatprep.subr.bf16.mxu0 0
        %436 = vmatpush1.bf16.xpose.msra.mxu0 0
        %437 = vmatprep.subr.bf16.mxu0 0
        %438 = vmatpush1.bf16.xpose.msra.mxu0 0
        %439 = vmatprep.subr.bf16.mxu0 0
        %440 = vmatpush1.bf16.xpose.msra.mxu0 0
        %441 = vmatprep.subr.bf16.mxu0 0
        %442 = vmatpush1.bf16.xpose.msra.mxu0 0
        %443 = vmatprep.subr.bf16.mxu0 0
        %444 = vmatpush1.bf16.xpose.msra.mxu0 0
        %445 = vmatprep.subr.bf16.mxu0 0
        %446 = vmatpush1.bf16.xpose.msra.mxu0 0
        %447 = vmatprep.subr.bf16.mxu0 0
        %448 = vmatpush1.bf16.xpose.msra.mxu0 0
        %449 = vmatprep.subr.bf16.mxu0 0
        %450 = vmatpush1.bf16.xpose.msra.mxu0 0
        %451 = vmatprep.subr.bf16.mxu0 0
        %452 = vmatpush1.bf16.xpose.msra.mxu0 0
        %453 = vmatprep.subr.bf16.mxu0 0
        %454 = vmatpush1.bf16.xpose.msra.mxu0 0
        %455 = vmatprep.mubr.bf16.mxu0 0
        %456 = vmatmul.mubr.bf16.gmra.mrb[0].mxu0 %v418
        %v457 = vpop.f32.mrb[0].mxu0
        %v458 = vadd.f32 0.0, %v457
        %v459 = vpop.f32.mrb[0].mxu0
        %v460 = vpop.f32.mrb[0].mxu0
        %v461 = vpop.f32.mrb[0].mxu0
        %462 = vdwg.mxu0
        %v463 = vsel %vm416, %v458, -inf
        %464 = vmax.xlane.f32.xlu0 %v463
        %v465 = vpop.xlane.xlu0 %464
        %v466 = vsub.f32 %v458, %v465
        %v467 = vmul.f32 %v466, 1.442695
        %v468 = vpow.pop %v467
        %v469 = vsel %vm416, %v468, 0.0
        %470 = vadd.xlane.f32.xlu0 %v469
        %v471 = vpop.xlane.xlu0 %470
        %v472 = vrcp.pop %v471
        %v473 = vmul.f32 %v468, %v472
        %v474 = vpack.c.bf16 %v473, %v473
        %475 = vrot.lane.b32.xlu0 %v412, 64
        %v476 = vpop.permute.xlu0 %475
        %v478 = vsel %vm416, %v474, 0
        %vm480 = vcmask 1043456
        %v482 = vsel %vm480, %v476, 0
        %484 = vmatprep.subr.bf16.mxu0 0
        %485 = vmatpush1.bf16.msra.mxu0 %v482
        %486 = vmatprep.subr.bf16.mxu0 0
        %487 = vmatpush1.bf16.msra.mxu0 0
        %488 = vmatprep.subr.bf16.mxu0 0
        %489 = vmatpush1.bf16.msra.mxu0 0
        %490 = vmatprep.subr.bf16.mxu0 0
        %491 = vmatpush1.bf16.msra.mxu0 0
        %492 = vmatprep.subr.bf16.mxu0 0
        %493 = vmatpush1.bf16.msra.mxu0 0
        %494 = vmatprep.subr.bf16.mxu0 0
        %495 = vmatpush1.bf16.msra.mxu0 0
        %496 = vmatprep.subr.bf16.mxu0 0
        %497 = vmatpush1.bf16.msra.mxu0 0
        %498 = vmatprep.subr.bf16.mxu0 0
        %499 = vmatpush1.bf16.msra.mxu0 0
        %500 = vmatprep.subr.bf16.mxu0 0
        %501 = vmatpush1.bf16.msra.mxu0 0
        %502 = vmatprep.subr.bf16.mxu0 0
        %503 = vmatpush1.bf16.msra.mxu0 0
        %504 = vmatprep.subr.bf16.mxu0 0
        %505 = vmatpush1.bf16.msra.mxu0 0
        %506 = vmatprep.subr.bf16.mxu0 0
        %507 = vmatpush1.bf16.msra.mxu0 0
        %508 = vmatprep.subr.bf16.mxu0 0
        %509 = vmatpush1.bf16.msra.mxu0 0
        %510 = vmatprep.subr.bf16.mxu0 0
        %511 = vmatpush1.bf16.msra.mxu0 0
        %512 = vmatprep.subr.bf16.mxu0 0
        %513 = vmatpush1.bf16.msra.mxu0 0
        %514 = vmatprep.subr.bf16.mxu0 0
        %515 = vmatpush1.bf16.msra.mxu0 0
        %516 = vmatprep.mubr.bf16.mxu0 0
        %517 = vmatmul.mubr.bf16.gmra.mrb[0].mxu0 %v478
        %v518 = vpop.f32.mrb[0].mxu0
        %v519 = vadd.f32 0.0, %v518
        %v520 = vpop.f32.mrb[0].mxu0
        %v521 = vpop.f32.mrb[0].mxu0
        %v522 = vpop.f32.mrb[0].mxu0
        %523 = vdwg.mxu0
        %524 = vst.msk [vmem:[#allocation2] sm:$0xff] %vm416, %v519
        %525 = vrot.lane.b32.xlu0 %v412, 120
        %v526 = vpop.permute.xlu0 %525
        %527 = vrot.lane.b32.xlu0 %v412, 88
        %v528 = vpop.permute.xlu0 %527
        %v530 = vsel %vm416, %v526, 0
        %v533 = vsel %vm416, %v528, 0
        %535 = vmatprep.subr.bf16.mxu0 0
        %536 = vmatpush1.bf16.xpose.msra.mxu0 %v533
        %537 = vmatprep.subr.bf16.mxu0 0
        %538 = vmatpush1.bf16.xpose.msra.mxu0 0
        %539 = vmatprep.subr.bf16.mxu0 0
        %540 = vmatpush1.bf16.xpose.msra.mxu0 0
        %541 = vmatprep.subr.bf16.mxu0 0
        %542 = vmatpush1.bf16.xpose.msra.mxu0 0
        %543 = vmatprep.subr.bf16.mxu0 0
        %544 = vmatpush1.bf16.xpose.msra.mxu0 0
        %545 = vmatprep.subr.bf16.mxu0 0
        %546 = vmatpush1.bf16.xpose.msra.mxu0 0
        %547 = vmatprep.subr.bf16.mxu0 0
        %548 = vmatpush1.bf16.xpose.msra.mxu0 0
        %549 = vmatprep.subr.bf16.mxu0 0
        %550 = vmatpush1.bf16.xpose.msra.mxu0 0
        %551 = vmatprep.subr.bf16.mxu0 0
        %552 = vmatpush1.bf16.xpose.msra.mxu0 0
        %553 = vmatprep.subr.bf16.mxu0 0
        %554 = vmatpush1.bf16.xpose.msra.mxu0 0
        %555 = vmatprep.subr.bf16.mxu0 0
        %556 = vmatpush1.bf16.xpose.msra.mxu0 0
        %557 = vmatprep.subr.bf16.mxu0 0
        %558 = vmatpush1.bf16.xpose.msra.mxu0 0
        %559 = vmatprep.subr.bf16.mxu0 0
        %560 = vmatpush1.bf16.xpose.msra.mxu0 0
        %561 = vmatprep.subr.bf16.mxu0 0
        %562 = vmatpush1.bf16.xpose.msra.mxu0 0
        %563 = vmatprep.subr.bf16.mxu0 0
        %564 = vmatpush1.bf16.xpose.msra.mxu0 0
        %565 = vmatprep.subr.bf16.mxu0 0
        %566 = vmatpush1.bf16.xpose.msra.mxu0 0
        %567 = vmatprep.mubr.bf16.mxu0 0
        %568 = vmatmul.mubr.bf16.gmra.mrb[0].mxu0 %v530
        %v569 = vpop.f32.mrb[0].mxu0
        %v570 = vadd.f32 0.0, %v569
        %v571 = vpop.f32.mrb[0].mxu0
        %v572 = vpop.f32.mrb[0].mxu0
        %v573 = vpop.f32.mrb[0].mxu0
        %574 = vdwg.mxu0
        %v575 = vsel %vm416, %v570, -inf
        %576 = vmax.xlane.f32.xlu0 %v575
        %v577 = vpop.xlane.xlu0 %576
        %v578 = vsub.f32 %v570, %v577
        %v579 = vmul.f32 %v578, 1.442695
        %v580 = vpow.pop %v579
        %v581 = vsel %vm416, %v580, 0.0
        %582 = vadd.xlane.f32.xlu0 %v581
        %v583 = vpop.xlane.xlu0 %582
        %v584 = vrcp.pop %v583
        %v585 = vmul.f32 %v580, %v584
        %v586 = vpack.c.bf16 %v585, %v585
        %587 = vrot.lane.b32.xlu0 %v412, 56
        %v588 = vpop.permute.xlu0 %587
        %v590 = vsel %vm416, %v586, 0
        %v593 = vsel %vm480, %v588, 0
        %595 = vmatprep.subr.bf16.mxu0 0
        %596 = vmatpush1.bf16.msra.mxu0 %v593
        %597 = vmatprep.subr.bf16.mxu0 0
        %598 = vmatpush1.bf16.msra.mxu0 0
        %599 = vmatprep.subr.bf16.mxu0 0
        %600 = vmatpush1.bf16.msra.mxu0 0
        %601 = vmatprep.subr.bf16.mxu0 0
        %602 = vmatpush1.bf16.msra.mxu0 0
        %603 = vmatprep.subr.bf16.mxu0 0
        %604 = vmatpush1.bf16.msra.mxu0 0
        %605 = vmatprep.subr.bf16.mxu0 0
        %606 = vmatpush1.bf16.msra.mxu0 0
        %607 = vmatprep.subr.bf16.mxu0 0
        %608 = vmatpush1.bf16.msra.mxu0 0
        %609 = vmatprep.subr.bf16.mxu0 0
        %610 = vmatpush1.bf16.msra.mxu0 0
        %611 = vmatprep.subr.bf16.mxu0 0
        %612 = vmatpush1.bf16.msra.mxu0 0
        %613 = vmatprep.subr.bf16.mxu0 0
        %614 = vmatpush1.bf16.msra.mxu0 0
        %615 = vmatprep.subr.bf16.mxu0 0
        %616 = vmatpush1.bf16.msra.mxu0 0
        %617 = vmatprep.subr.bf16.mxu0 0
        %618 = vmatpush1.bf16.msra.mxu0 0
        %619 = vmatprep.subr.bf16.mxu0 0
        %620 = vmatpush1.bf16.msra.mxu0 0
        %621 = vmatprep.subr.bf16.mxu0 0
        %622 = vmatpush1.bf16.msra.mxu0 0
        %623 = vmatprep.subr.bf16.mxu0 0
        %624 = vmatpush1.bf16.msra.mxu0 0
        %625 = vmatprep.subr.bf16.mxu0 0
        %626 = vmatpush1.bf16.msra.mxu0 0
        %627 = vmatprep.mubr.bf16.mxu0 0
        %628 = vmatmul.mubr.bf16.gmra.mrb[0].mxu0 %v590
        %v629 = vpop.f32.mrb[0].mxu0
        %v630 = vadd.f32 0.0, %v629
        %v631 = vpop.f32.mrb[0].mxu0
        %v632 = vpop.f32.mrb[0].mxu0
        %v633 = vpop.f32.mrb[0].mxu0
        %634 = vdwg.mxu0
        %636 = vrot.lane.b32.xlu0 %v630, 8
        %v637 = vpop.permute.xlu0 %636
        %vm639 = vcmask 130112
        %640 = vst.msk [vmem:[#allocation2] sm:$0xff] %vm639, %v637
        %641 = vrot.lane.b32.xlu0 %v412, 112
        %v642 = vpop.permute.xlu0 %641
        %643 = vrot.lane.b32.xlu0 %v412, 80
        %v644 = vpop.permute.xlu0 %643
        %v646 = vsel %vm416, %v642, 0
        %v649 = vsel %vm416, %v644, 0
        %651 = vmatprep.subr.bf16.mxu0 0
        %652 = vmatpush1.bf16.xpose.msra.mxu0 %v649
        %653 = vmatprep.subr.bf16.mxu0 0
        %654 = vmatpush1.bf16.xpose.msra.mxu0 0
        %655 = vmatprep.subr.bf16.mxu0 0
        %656 = vmatpush1.bf16.xpose.msra.mxu0 0
        %657 = vmatprep.subr.bf16.mxu0 0
        %658 = vmatpush1.bf16.xpose.msra.mxu0 0
        %659 = vmatprep.subr.bf16.mxu0 0
        %660 = vmatpush1.bf16.xpose.msra.mxu0 0
        %661 = vmatprep.subr.bf16.mxu0 0
        %662 = vmatpush1.bf16.xpose.msra.mxu0 0
        %663 = vmatprep.subr.bf16.mxu0 0
        %664 = vmatpush1.bf16.xpose.msra.mxu0 0
        %665 = vmatprep.subr.bf16.mxu0 0
        %666 = vmatpush1.bf16.xpose.msra.mxu0 0
        %667 = vmatprep.subr.bf16.mxu0 0
        %668 = vmatpush1.bf16.xpose.msra.mxu0 0
        %669 = vmatprep.subr.bf16.mxu0 0
        %670 = vmatpush1.bf16.xpose.msra.mxu0 0
        %671 = vmatprep.subr.bf16.mxu0 0
        %672 = vmatpush1.bf16.xpose.msra.mxu0 0
        %673 = vmatprep.subr.bf16.mxu0 0
        %674 = vmatpush1.bf16.xpose.msra.mxu0 0
        %675 = vmatprep.subr.bf16.mxu0 0
        %676 = vmatpush1.bf16.xpose.msra.mxu0 0
        %677 = vmatprep.subr.bf16.mxu0 0
        %678 = vmatpush1.bf16.xpose.msra.mxu0 0
        %679 = vmatprep.subr.bf16.mxu0 0
        %680 = vmatpush1.bf16.xpose.msra.mxu0 0
        %681 = vmatprep.subr.bf16.mxu0 0
        %682 = vmatpush1.bf16.xpose.msra.mxu0 0
        %683 = vmatprep.mubr.bf16.mxu0 0
        %684 = vmatmul.mubr.bf16.gmra.mrb[0].mxu0 %v646
        %v685 = vpop.f32.mrb[0].mxu0
        %v686 = vadd.f32 0.0, %v685
        %v687 = vpop.f32.mrb[0].mxu0
        %v688 = vpop.f32.mrb[0].mxu0
        %v689 = vpop.f32.mrb[0].mxu0
        %690 = vdwg.mxu0
        %v691 = vsel %vm416, %v686, -inf
        %692 = vmax.xlane.f32.xlu0 %v691
        %v693 = vpop.xlane.xlu0 %692
        %v694 = vsub.f32 %v686, %v693
        %v695 = vmul.f32 %v694, 1.442695
        %v696 = vpow.pop %v695
        %v697 = vsel %vm416, %v696, 0.0
        %698 = vadd.xlane.f32.xlu0 %v697
        %v699 = vpop.xlane.xlu0 %698
        %v700 = vrcp.pop %v699
        %v701 = vmul.f32 %v696, %v700
        %v702 = vpack.c.bf16 %v701, %v701
        %703 = vrot.lane.b32.xlu0 %v412, 48
        %v704 = vpop.permute.xlu0 %703
        %v706 = vsel %vm416, %v702, 0
        %v709 = vsel %vm480, %v704, 0
        %711 = vmatprep.subr.bf16.mxu0 0
        %712 = vmatpush1.bf16.msra.mxu0 %v709
        %713 = vmatprep.subr.bf16.mxu0 0
        %714 = vmatpush1.bf16.msra.mxu0 0
        %715 = vmatprep.subr.bf16.mxu0 0
        %716 = vmatpush1.bf16.msra.mxu0 0
        %717 = vmatprep.subr.bf16.mxu0 0
        %718 = vmatpush1.bf16.msra.mxu0 0
        %719 = vmatprep.subr.bf16.mxu0 0
        %720 = vmatpush1.bf16.msra.mxu0 0
        %721 = vmatprep.subr.bf16.mxu0 0
        %722 = vmatpush1.bf16.msra.mxu0 0
        %723 = vmatprep.subr.bf16.mxu0 0
        %724 = vmatpush1.bf16.msra.mxu0 0
        %725 = vmatprep.subr.bf16.mxu0 0
        %726 = vmatpush1.bf16.msra.mxu0 0
        %727 = vmatprep.subr.bf16.mxu0 0
        %728 = vmatpush1.bf16.msra.mxu0 0
        %729 = vmatprep.subr.bf16.mxu0 0
        %730 = vmatpush1.bf16.msra.mxu0 0
        %731 = vmatprep.subr.bf16.mxu0 0
        %732 = vmatpush1.bf16.msra.mxu0 0
        %733 = vmatprep.subr.bf16.mxu0 0
        %734 = vmatpush1.bf16.msra.mxu0 0
        %735 = vmatprep.subr.bf16.mxu0 0
        %736 = vmatpush1.bf16.msra.mxu0 0
        %737 = vmatprep.subr.bf16.mxu0 0
        %738 = vmatpush1.bf16.msra.mxu0 0
        %739 = vmatprep.subr.bf16.mxu0 0
        %740 = vmatpush1.bf16.msra.mxu0 0
        %741 = vmatprep.subr.bf16.mxu0 0
        %742 = vmatpush1.bf16.msra.mxu0 0
        %743 = vmatprep.mubr.bf16.mxu0 0
        %744 = vmatmul.mubr.bf16.gmra.mrb[0].mxu0 %v706
        %v745 = vpop.f32.mrb[0].mxu0
        %v746 = vadd.f32 0.0, %v745
        %v747 = vpop.f32.mrb[0].mxu0
        %v748 = vpop.f32.mrb[0].mxu0
        %v749 = vpop.f32.mrb[0].mxu0
        %750 = vdwg.mxu0
        %752 = vrot.lane.b32.xlu0 %v746, 16
        %v753 = vpop.permute.xlu0 %752
        %vm755 = vcmask 195712
        %756 = vst.msk [vmem:[#allocation2] sm:$0xff] %vm755, %v753
        %757 = vrot.lane.b32.xlu0 %v412, 104
        %v758 = vpop.permute.xlu0 %757
        %759 = vrot.lane.b32.xlu0 %v412, 72
        %v760 = vpop.permute.xlu0 %759
        %v762 = vsel %vm416, %v758, 0
        %v765 = vsel %vm416, %v760, 0
        %767 = vmatprep.subr.bf16.mxu0 0
        %768 = vmatpush1.bf16.xpose.msra.mxu0 %v765
        %769 = vmatprep.subr.bf16.mxu0 0
        %770 = vmatpush1.bf16.xpose.msra.mxu0 0
        %771 = vmatprep.subr.bf16.mxu0 0
        %772 = vmatpush1.bf16.xpose.msra.mxu0 0
        %773 = vmatprep.subr.bf16.mxu0 0
        %774 = vmatpush1.bf16.xpose.msra.mxu0 0
        %775 = vmatprep.subr.bf16.mxu0 0
        %776 = vmatpush1.bf16.xpose.msra.mxu0 0
        %777 = vmatprep.subr.bf16.mxu0 0
        %778 = vmatpush1.bf16.xpose.msra.mxu0 0
        %779 = vmatprep.subr.bf16.mxu0 0
        %780 = vmatpush1.bf16.xpose.msra.mxu0 0
        %781 = vmatprep.subr.bf16.mxu0 0
        %782 = vmatpush1.bf16.xpose.msra.mxu0 0
        %783 = vmatprep.subr.bf16.mxu0 0
        %784 = vmatpush1.bf16.xpose.msra.mxu0 0
        %785 = vmatprep.subr.bf16.mxu0 0
        %786 = vmatpush1.bf16.xpose.msra.mxu0 0
        %787 = vmatprep.subr.bf16.mxu0 0
        %788 = vmatpush1.bf16.xpose.msra.mxu0 0
        %789 = vmatprep.subr.bf16.mxu0 0
        %790 = vmatpush1.bf16.xpose.msra.mxu0 0
        %791 = vmatprep.subr.bf16.mxu0 0
        %792 = vmatpush1.bf16.xpose.msra.mxu0 0
        %793 = vmatprep.subr.bf16.mxu0 0
        %794 = vmatpush1.bf16.xpose.msra.mxu0 0
        %795 = vmatprep.subr.bf16.mxu0 0
        %796 = vmatpush1.bf16.xpose.msra.mxu0 0
        %797 = vmatprep.subr.bf16.mxu0 0
        %798 = vmatpush1.bf16.xpose.msra.mxu0 0
        %799 = vmatprep.mubr.bf16.mxu0 0
        %800 = vmatmul.mubr.bf16.gmra.mrb[0].mxu0 %v762
        %v801 = vpop.f32.mrb[0].mxu0
        %v802 = vadd.f32 0.0, %v801
        %v803 = vpop.f32.mrb[0].mxu0
        %v804 = vpop.f32.mrb[0].mxu0
        %v805 = vpop.f32.mrb[0].mxu0
        %806 = vdwg.mxu0
        %v807 = vsel %vm416, %v802, -inf
        %808 = vmax.xlane.f32.xlu0 %v807
        %v809 = vpop.xlane.xlu0 %808
        %v810 = vsub.f32 %v802, %v809
        %v811 = vmul.f32 %v810, 1.442695
        %v812 = vpow.pop %v811
        %v813 = vsel %vm416, %v812, 0.0
        %814 = vadd.xlane.f32.xlu0 %v813
        %v815 = vpop.xlane.xlu0 %814
        %v816 = vrcp.pop %v815
        %v817 = vmul.f32 %v812, %v816
        %v818 = vpack.c.bf16 %v817, %v817
        %819 = vrot.lane.b32.xlu0 %v412, 40
        %v820 = vpop.permute.xlu0 %819
        %v822 = vsel %vm416, %v818, 0
        %v825 = vsel %vm480, %v820, 0
        %827 = vmatprep.subr.bf16.mxu0 0
        %828 = vmatpush1.bf16.msra.mxu0 %v825
        %829 = vmatprep.subr.bf16.mxu0 0
        %830 = vmatpush1.bf16.msra.mxu0 0
        %831 = vmatprep.subr.bf16.mxu0 0
        %832 = vmatpush1.bf16.msra.mxu0 0
        %833 = vmatprep.subr.bf16.mxu0 0
        %834 = vmatpush1.bf16.msra.mxu0 0
        %835 = vmatprep.subr.bf16.mxu0 0
        %836 = vmatpush1.bf16.msra.mxu0 0
        %837 = vmatprep.subr.bf16.mxu0 0
        %838 = vmatpush1.bf16.msra.mxu0 0
        %839 = vmatprep.subr.bf16.mxu0 0
        %840 = vmatpush1.bf16.msra.mxu0 0
        %841 = vmatprep.subr.bf16.mxu0 0
        %842 = vmatpush1.bf16.msra.mxu0 0
        %843 = vmatprep.subr.bf16.mxu0 0
        %844 = vmatpush1.bf16.msra.mxu0 0
        %845 = vmatprep.subr.bf16.mxu0 0
        %846 = vmatpush1.bf16.msra.mxu0 0
        %847 = vmatprep.subr.bf16.mxu0 0
        %848 = vmatpush1.bf16.msra.mxu0 0
        %849 = vmatprep.subr.bf16.mxu0 0
        %850 = vmatpush1.bf16.msra.mxu0 0
        %851 = vmatprep.subr.bf16.mxu0 0
        %852 = vmatpush1.bf16.msra.mxu0 0
        %853 = vmatprep.subr.bf16.mxu0 0
        %854 = vmatpush1.bf16.msra.mxu0 0
        %855 = vmatprep.subr.bf16.mxu0 0
        %856 = vmatpush1.bf16.msra.mxu0 0
        %857 = vmatprep.subr.bf16.mxu0 0
        %858 = vmatpush1.bf16.msra.mxu0 0
        %859 = vmatprep.mubr.bf16.mxu0 0
        %860 = vmatmul.mubr.bf16.gmra.mrb[0].mxu0 %v822
        %v861 = vpop.f32.mrb[0].mxu0
        %v862 = vadd.f32 0.0, %v861
        %v863 = vpop.f32.mrb[0].mxu0
        %v864 = vpop.f32.mrb[0].mxu0
        %v865 = vpop.f32.mrb[0].mxu0
        %866 = vdwg.mxu0
        %868 = vrot.lane.b32.xlu0 %v862, 24
        %v869 = vpop.permute.xlu0 %868
        %vm871 = vcmask 261312
        %872 = vst.msk [vmem:[#allocation2] sm:$0xff] %vm871, %v869
        %v873 = vld [vmem:[#allocation2] sm:$0xff]
        %v874 = vpack.c.bf16 %v873, %v873
        %v875 = vld [vmem:[%s3] sm:$0xf]
        %v876 = vld [vmem:[%s3 + $0x4] sm:$0xf]
        %v877 = vld [vmem:[%s3 + $0x8] sm:$0xf]
        %v878 = vld [vmem:[%s3 + $0xc] sm:$0xf]
        %v879 = vld [vmem:[%s4] sm:$0x1]
        %v881 = vlaneseq
        %v882 = vshrl.u32 %v881, 7
        %v883 = vsub.s32 0, %v882
        %v884 = vrot.slane %v879, %v883
        %v890 = vunpack.c.l.b16 %v875
        %v891 = vunpack.c.l.b16 %v876
        %v892 = vunpack.c.l.b16 %v877
        %v893 = vunpack.c.l.b16 %v878
        %v894 = vpack.c.b16 %v891, %v890
        %v895 = vpack.c.b16 %v893, %v892
        %v899 = vsel %vm330, %v874, 0
        %901 = vmatprep.subr.bf16.mxu0 0
        %902 = vmatpush1.bf16.msra.mxu0 %v894
        %903 = vmatprep.subr.bf16.mxu0 0
        %904 = vmatpush1.bf16.msra.mxu0 %v895
        %905 = vmatprep.subr.bf16.mxu0 0
        %906 = vmatpush1.bf16.msra.mxu0 0
        %907 = vmatprep.subr.bf16.mxu0 0
        %908 = vmatpush1.bf16.msra.mxu0 0
        %909 = vmatprep.subr.bf16.mxu0 0
        %910 = vmatpush1.bf16.msra.mxu0 0
        %911 = vmatprep.subr.bf16.mxu0 0
        %912 = vmatpush1.bf16.msra.mxu0 0
        %913 = vmatprep.subr.bf16.mxu0 0
        %914 = vmatpush1.bf16.msra.mxu0 0
        %915 = vmatprep.subr.bf16.mxu0 0
        %916 = vmatpush1.bf16.msra.mxu0 0
        %917 = vmatprep.subr.bf16.mxu0 0
        %918 = vmatpush1.bf16.msra.mxu0 0
        %919 = vmatprep.subr.bf16.mxu0 0
        %920 = vmatpush1.bf16.msra.mxu0 0
        %921 = vmatprep.subr.bf16.mxu0 0
        %922 = vmatpush1.bf16.msra.mxu0 0
        %923 = vmatprep.subr.bf16.mxu0 0
        %924 = vmatpush1.bf16.msra.mxu0 0
        %925 = vmatprep.subr.bf16.mxu0 0
        %926 = vmatpush1.bf16.msra.mxu0 0
        %927 = vmatprep.subr.bf16.mxu0 0
        %928 = vmatpush1.bf16.msra.mxu0 0
        %929 = vmatprep.subr.bf16.mxu0 0
        %930 = vmatpush1.bf16.msra.mxu0 0
        %931 = vmatprep.subr.bf16.mxu0 0
        %932 = vmatpush1.bf16.msra.mxu0 0
        %933 = vmatprep.mubr.bf16.mxu0 0
        %934 = vmatmul.mubr.bf16.gmra.mrb[0].mxu0 %v899
        %v935 = vpop.f32.mrb[0].mxu0
        %v936 = vadd.f32 %v884, %v935
        %v937 = vpop.f32.mrb[0].mxu0
        %v938 = vpop.f32.mrb[0].mxu0
        %v939 = vpop.f32.mrb[0].mxu0
        %940 = vdwg.mxu0
        %v941 = vadd.f32 %v329, %v936
        %v942 = vsel %vm330, %v941, 0.0
        %943 = vadd.xlane.f32.xlu0 %v942
        %v944 = vpop.xlane.xlu0 %943
        %v945 = vmul.f32 %v944, %v334
        %v946 = vsub.f32 %v941, %v945
        %v947 = vmul.f32 %v946, %v946
        %v948 = vsel %vm330, %v947, 0.0
        %949 = vadd.xlane.f32.xlu0 %v948
        %v950 = vpop.xlane.xlu0 %949
        %v951 = vmul.f32 %v950, %v334
        %v952 = vadd.f32 %v951, 1e-05
        %v953 = vrsqrt.pop %v952
        %v954 = vmul.f32 %v946, %v953
        %v955 = vpack.c.bf16 %v954, %v954
        %v956 = vld [vmem:[%s5] sm:$0xf]
        %v957 = vld [vmem:[%s5 + $0x4] sm:$0xf]
        %v958 = vld [vmem:[%s5 + $0x8] sm:$0xf]
        %v959 = vld [vmem:[%s5 + $0xc] sm:$0xf]
        %v960 = vld [vmem:[%s6] sm:$0x1]
        %v962 = vlaneseq
        %v963 = vshrl.u32 %v962, 7
        %v964 = vsub.s32 0, %v963
        %v965 = vrot.slane %v960, %v964
        %v971 = vunpack.c.l.b16 %v956
        %v972 = vunpack.c.l.b16 %v957
        %v973 = vunpack.c.l.b16 %v958
        %v974 = vunpack.c.l.b16 %v959
        %v975 = vpack.c.b16 %v972, %v971
        %v976 = vpack.c.b16 %v974, %v973
        %v980 = vsel %vm330, %v955, 0
        %982 = vmatprep.subr.bf16.mxu0 0
        %983 = vmatpush1.bf16.msra.mxu0 %v975
        %984 = vmatprep.subr.bf16.mxu0 0
        %985 = vmatpush1.bf16.msra.mxu0 %v976
        %986 = vmatprep.subr.bf16.mxu0 0
        %987 = vmatpush1.bf16.msra.mxu0 0
        %988 = vmatprep.subr.bf16.mxu0 0
        %989 = vmatpush1.bf16.msra.mxu0 0
        %990 = vmatprep.subr.bf16.mxu0 0
        %991 = vmatpush1.bf16.msra.mxu0 0
        %992 = vmatprep.subr.bf16.mxu0 0
        %993 = vmatpush1.bf16.msra.mxu0 0
        %994 = vmatprep.subr.bf16.mxu0 0
        %995 = vmatpush1.bf16.msra.mxu0 0
        %996 = vmatprep.subr.bf16.mxu0 0
        %997 = vmatpush1.bf16.msra.mxu0 0
        %998 = vmatprep.subr.bf16.mxu0 0
        %999 = vmatpush1.bf16.msra.mxu0 0
        %1000 = vmatprep.subr.bf16.mxu0 0
        %1001 = vmatpush1.bf16.msra.mxu0 0
        %1002 = vmatprep.subr.bf16.mxu0 0
        %1003 = vmatpush1.bf16.msra.mxu0 0
        %1004 = vmatprep.subr.bf16.mxu0 0
        %1005 = vmatpush1.bf16.msra.mxu0 0
        %1006 = vmatprep.subr.bf16.mxu0 0
        %1007 = vmatpush1.bf16.msra.mxu0 0
        %1008 = vmatprep.subr.bf16.mxu0 0
        %1009 = vmatpush1.bf16.msra.mxu0 0
        %1010 = vmatprep.subr.bf16.mxu0 0
        %1011 = vmatpush1.bf16.msra.mxu0 0
        %1012 = vmatprep.subr.bf16.mxu0 0
        %1013 = vmatpush1.bf16.msra.mxu0 0
        %1014 = vmatprep.mubr.bf16.mxu0 0
        %1015 = vmatmul.mubr.bf16.gmra.mrb[0].mxu0 %v980
        %v1016 = vpop.f32.mrb[0].mxu0
        %v1017 = vadd.f32 %v965, %v1016
        %v1018 = vpop.f32.mrb[0].mxu0
        %v1019 = vpop.f32.mrb[0].mxu0
        %v1020 = vpop.f32.mrb[0].mxu0
        %1021 = vdwg.mxu0
        %v1022 = vmax.f32 %v1017, 0.0
        %v1023 = vpack.c.bf16 %v1022, %v1022
        %v1024 = vld [vmem:[%s7] sm:$0xf]
        %v1025 = vld [vmem:[%s7 + $0x4] sm:$0xf]
        %v1026 = vld [vmem:[%s7 + $0x8] sm:$0xf]
        %v1027 = vld [vmem:[%s7 + $0xc] sm:$0xf]
        %v1028 = vld [vmem:[%s7 + $0x10] sm:$0xf]
        %v1029 = vld [vmem:[%s7 + $0x14] sm:$0xf]
        %v1030 = vld [vmem:[%s7 + $0x18] sm:$0xf]
        %v1031 = vld [vmem:[%s7 + $0x1c] sm:$0xf]
        %v1032 = vld [vmem:[%s7 + $0x20] sm:$0xf]
        %v1033 = vld [vmem:[%s7 + $0x24] sm:$0xf]
        %v1034 = vld [vmem:[%s7 + $0x28] sm:$0xf]
        %v1035 = vld [vmem:[%s7 + $0x2c] sm:$0xf]
        %v1036 = vld [vmem:[%s7 + $0x30] sm:$0xf]
        %v1037 = vld [vmem:[%s7 + $0x34] sm:$0xf]
        %v1038 = vld [vmem:[%s7 + $0x38] sm:$0xf]
        %v1039 = vld [vmem:[%s7 + $0x3c] sm:$0xf]
        %v1040 = vld [vmem:[%s8] sm:$0x1]
        %v1042 = vlaneseq
        %v1043 = vshrl.u32 %v1042, 7
        %v1044 = vsub.s32 0, %v1043
        %v1045 = vrot.slane %v1040, %v1044
        %v1063 = vunpack.c.l.b16 %v1024
        %v1064 = vunpack.c.l.b16 %v1025
        %v1065 = vunpack.c.l.b16 %v1026
        %v1066 = vunpack.c.l.b16 %v1027
        %v1067 = vunpack.c.l.b16 %v1028
        %v1068 = vunpack.c.l.b16 %v1029
        %v1069 = vunpack.c.l.b16 %v1030
        %v1070 = vunpack.c.l.b16 %v1031
        %v1071 = vunpack.c.l.b16 %v1032
        %v1072 = vunpack.c.l.b16 %v1033
        %v1073 = vunpack.c.l.b16 %v1034
        %v1074 = vunpack.c.l.b16 %v1035
        %v1075 = vunpack.c.l.b16 %v1036
        %v1076 = vunpack.c.l.b16 %v1037
        %v1077 = vunpack.c.l.b16 %v1038
        %v1078 = vunpack.c.l.b16 %v1039
        %v1079 = vpack.c.b16 %v1064, %v1063
        %v1080 = vpack.c.b16 %v1066, %v1065
        %v1081 = vpack.c.b16 %v1068, %v1067
        %v1082 = vpack.c.b16 %v1070, %v1069
        %v1083 = vpack.c.b16 %v1072, %v1071
        %v1084 = vpack.c.b16 %v1074, %v1073
        %v1085 = vpack.c.b16 %v1076, %v1075
        %v1086 = vpack.c.b16 %v1078, %v1077
        %1095 = vmatprep.subr.bf16.mxu0 0
        %1096 = vmatpush1.bf16.msra.mxu0 %v1079
        %1097 = vmatprep.subr.bf16.mxu0 0
        %1098 = vmatpush1.bf16.msra.mxu0 %v1080
        %1099 = vmatprep.subr.bf16.mxu0 0
        %1100 = vmatpush1.bf16.msra.mxu0 %v1081
        %1101 = vmatprep.subr.bf16.mxu0 0
        %1102 = vmatpush1.bf16.msra.mxu0 %v1082
        %1103 = vmatprep.subr.bf16.mxu0 0
        %1104 = vmatpush1.bf16.msra.mxu0 %v1083
        %1105 = vmatprep.subr.bf16.mxu0 0
        %1106 = vmatpush1.bf16.msra.mxu0 %v1084
        %1107 = vmatprep.subr.bf16.mxu0 0
        %1108 = vmatpush1.bf16.msra.mxu0 %v1085
        %1109 = vmatprep.subr.bf16.mxu0 0
        %1110 = vmatpush1.bf16.msra.mxu0 %v1086
        %1111 = vmatprep.subr.bf16.mxu0 0
        %1112 = vmatpush1.bf16.msra.mxu0 0
        %1113 = vmatprep.subr.bf16.mxu0 0
        %1114 = vmatpush1.bf16.msra.mxu0 0
        %1115 = vmatprep.subr.bf16.mxu0 0
        %1116 = vmatpush1.bf16.msra.mxu0 0
        %1117 = vmatprep.subr.bf16.mxu0 0
        %1118 = vmatpush1.bf16.msra.mxu0 0
        %1119 = vmatprep.subr.bf16.mxu0 0
        %1120 = vmatpush1.bf16.msra.mxu0 0
        %1121 = vmatprep.subr.bf16.mxu0 0
        %1122 = vmatpush1.bf16.msra.mxu0 0
        %1123 = vmatprep.subr.bf16.mxu0 0
        %1124 = vmatpush1.bf16.msra.mxu0 0
        %1125 = vmatprep.subr.bf16.mxu0 0
        %1126 = vmatpush1.bf16.msra.mxu0 0
        %1127 = vmatprep.mubr.bf16.mxu0 0
        %1128 = vmatmul.mubr.bf16.gmra.mrb[0].mxu0 %v1023
        %v1129 = vpop.f32.mrb[0].mxu0
        %v1130 = vadd.f32 %v1045, %v1129
        %v1131 = vpop.f32.mrb[0].mxu0
        %v1132 = vpop.f32.mrb[0].mxu0
        %v1133 = vpop.f32.mrb[0].mxu0
        %1134 = vdwg.mxu0
        %v1135 = vadd.f32 %v941, %v1130
        %1136 = vst.msk [vmem:[%s323] sm:$0xff] %vm330, %v1135
        %s1137 = sand.u32 %s225, 1
        %s1138 = scalar_lea.sflag [#allocation4], %s1137
        %s1139 = sand.u32 %s225, 1
        %s1140 = smul.addr %s1139, 8
        %s1141 = scalar_lea.vmem [#allocation3], %s1140
        // Predicated region
        $region57: #{tpu_custom_call.1} parent=55 // pred_check
          %p1142 = pneg %p235
        $region58: #{tpu_custom_call.1} parent=55 // pred_check_branch
          %1144 = sbr.rel (%p1142) target = $region60
        $region59: #{tpu_custom_call.1} parent=55 // pred_region
          %s1146 = ssub.s32 128, 128
          %1147 = vsyncadd %s1138, %s1146
          %s1148 = smul.addr %s23, 128
          %s1149 = scalar_lea.hbm %s9, %s1148
          %s1151 = sshll.u32 %s1141, 4
          %s1152 = int_to_ptr.vmem [resolvable:$true] %s1151
          %1154 = dma.vmem_to_hbm [thread:$0]  %s1152, 128, %s1149, %s1138
        $region60: #{tpu_custom_call.1} parent=55 // pred_fallthru
          _
      $region56: #{tpu_custom_call.1} parent=5 // pred_fallthru
        _
      %p1155 = scmp.le.s32.totalorder 2, %s18
      // Predicated region
      $region61: #{tpu_custom_call.1} parent=5 // pred_check
        %p1156 = pneg %p1155
      $region62: #{tpu_custom_call.1} parent=5 // pred_check_branch
        %1158 = sbr.rel (%p1156) target = $region64
      $region63: #{tpu_custom_call.1} parent=5 // pred_region
        %s1159 = ssub.s32 %s18, 2
        // Predicated region
        $region65: #{tpu_custom_call.1} parent=63 // pred_check
          %p1160 = pneg %p241
        $region66: #{tpu_custom_call.1} parent=63 // pred_check_branch
          %1162 = sbr.rel (%p1160) target = $region68
        $region67: #{tpu_custom_call.1} parent=63 // pred_region
          %s1163 = sand.u32 %s226, 1
          %s1164 = scalar_lea.sflag [#allocation4], %s1163
          %s1165 = sand.u32 %s226, 1
          %s1166 = smul.addr %s1165, 8
          %s1167 = scalar_lea.vmem [#allocation3], %s1166
          %1168 = dma.done %s1164, 128
        $region68: #{tpu_custom_call.1} parent=63 // pred_fallthru
          _
      $region64: #{tpu_custom_call.1} parent=5 // pred_fallthru
        _
    $region6: #{tpu_custom_call.1} parent=1 // loop_footer
      %s22 = sadd.s32 1, %s18
    $region7: #{tpu_custom_call.1} parent=1 // loop_footer_branch
      %17 = sbr.rel target = $region3
    $region8: #{tpu_custom_call.1} parent=1 // loop_exit
      _
    %1169 = vsyncpa [#allocation4], 1
    %s1170 = scalar_lea.sflag [#allocation4], 1
    %1171 = vsyncpa %s1170, 1

</llo_original>
